<compile_context>
chip_gen: v7x
topology: tpu7x:2x2x1
jax: 0.10.0
libtpu: 0.0.40
codegen_flags: <defaults>
</compile_context>

<pallas_src>
import functools
import math

import jax
import jax.numpy as jnp
import numpy as np
from jax.experimental import pallas as pl
from jax.experimental.pallas import tpu as pltpu


def _mha_kernel(q_ref, k_ref, v_ref,
                wq_ref, wk_ref, wv_ref,
                bq_ref, bk_ref, bv_ref,
                wo_ref, bo_ref,
                out_ref, attnw_ref,
                ctx_ref,
                *, num_heads, head_dim, scaling, inv_heads):
    """One (batch, L-tile) grid step.

    q_ref:   [1, bl, E] bf16      k_ref/v_ref: [1, S, E] bf16
    wq/wk/wv_ref: [E, E] bf16     (pre-transposed: x @ w == x @ W^T)
    bq/bk/bv_ref: [1, E] f32
    wo_ref:  [E, E] bf16          (pre-transposed out_proj.weight)
    bo_ref:  [1, E] f32
    out_ref:   [1, bl, E]         attention output block
    attnw_ref: [1, bl, S] f32     head-averaged attention weights
    ctx_ref:   [bl, E] bf16       VMEM scratch for per-head contexts
    """
    d = head_dim

    xq = q_ref[0]                                   # [bl, E] bf16
    xk = k_ref[0]                                   # [S, E]  bf16
    xv = v_ref[0]                                   # [S, E]  bf16

    # Fused full-E projections (bf16 in, f32 accumulate on the MXU).
    q = (jnp.dot(xq, wq_ref[...], preferred_element_type=jnp.float32)
         + bq_ref[...]) * scaling                   # [bl, E] f32
    k = jnp.dot(xk, wk_ref[...], preferred_element_type=jnp.float32) + bk_ref[...]
    v = jnp.dot(xv, wv_ref[...], preferred_element_type=jnp.float32) + bv_ref[...]

    q = q.astype(jnp.bfloat16)
    k = k.astype(jnp.bfloat16)
    v = v.astype(jnp.bfloat16)

    attnw_sum = None
    for h in range(num_heads):                      # static unroll; static slices
        lo = h * d
        hi = lo + d
        qh = q[:, lo:hi]                            # [bl, d]
        kh = k[:, lo:hi]                            # [S, d]
        vh = v[:, lo:hi]                            # [S, d]

        # scores[l, s] = sum_d qh[l, d] * kh[s, d]  (contract last dims, no .T)
        scores = jnp.einsum('ld,sd->ls', qh, kh,
                            preferred_element_type=jnp.float32)   # [bl, S] f32

        # Numerically-stable softmax; divide goes to the EUP via approx reciprocal.
        m = jnp.max(scores, axis=-1, keepdims=True)
        p = jnp.exp(scores - m)
        denom = jnp.sum(p, axis=-1, keepdims=True)
        attn = p * pl.reciprocal(denom, approx=True)              # [bl, S] f32

        ctx_h = jnp.dot(attn.astype(jnp.bfloat16), vh,
                        preferred_element_type=jnp.float32)       # [bl, d] f32
        ctx_ref[:, lo:hi] = ctx_h.astype(ctx_ref.dtype)

        attnw_sum = attn if attnw_sum is None else attnw_sum + attn

    # Single fused output projection + bias.
    out = (jnp.dot(ctx_ref[...], wo_ref[...],
                   preferred_element_type=jnp.float32) + bo_ref[...])   # [bl, E]
    out_ref[0] = out.astype(out_ref.dtype)
    attnw_ref[0] = (attnw_sum * inv_heads).astype(attnw_ref.dtype)


def _pick_l_block(L, max_block=512):
    """Largest L tile <= max_block that is a divisor of L and a multiple of 8
    (or L itself when L is small)."""
    if L <= max_block:
        return L
    for b in range(max_block, 7, -1):
        if L % b == 0 and b % 8 == 0:
            return b
    return L


def multihead_attention_forward(query, key, value, params, num_heads):
    """query: [L, N, E]; key/value: [S, N, E]  (PyTorch seq-first layout).

    Returns (attn_output [L, N, E], attn_output_weights [N, L, S]) — same as
    nn.MultiheadAttention.forward with need_weights=True and no masks.
    """
    L, N, E = query.shape
    S = key.shape[0]
    assert E % num_heads == 0
    d = E // num_heads
    scaling = float(d) ** -0.5
    out_dtype = query.dtype

    w_in = params["in_proj_weight"]                        # [3E, E]
    b_in = params["in_proj_bias"].astype(jnp.float32)      # [3E]
    w_out = params["out_proj_weight"]                      # [E, E]
    b_out = params["out_proj_bias"].astype(jnp.float32)    # [E]

    # Pre-transpose in the wrapper (free XLA layout work) and cast weights to bf16:
    # the kernel only runs plain x @ W matmuls on the fast MXU path.
    wq = jnp.transpose(w_in[0 * E:1 * E]).astype(jnp.bfloat16)   # [E, E]
    wk = jnp.transpose(w_in[1 * E:2 * E]).astype(jnp.bfloat16)
    wv = jnp.transpose(w_in[2 * E:3 * E]).astype(jnp.bfloat16)
    wo = jnp.transpose(w_out).astype(jnp.bfloat16)               # [E, E]
    bq = b_in[0 * E:1 * E].reshape(1, E)
    bk = b_in[1 * E:2 * E].reshape(1, E)
    bv = b_in[2 * E:3 * E].reshape(1, E)
    bo = b_out.reshape(1, E)

    # Batch-major bf16 activations.
    q_nle = jnp.transpose(query, (1, 0, 2)).astype(jnp.bfloat16)   # [N, L, E]
    k_nse = jnp.transpose(key, (1, 0, 2)).astype(jnp.bfloat16)     # [N, S, E]
    v_nse = jnp.transpose(value, (1, 0, 2)).astype(jnp.bfloat16)   # [N, S, E]

    bl = _pick_l_block(L)
    n_l_blocks = L // bl

    batch_l = lambda n, l: (n, l, 0)
    batch0 = lambda n, l: (n, 0, 0)
    const2 = lambda n, l: (0, 0)

    kernel = functools.partial(_mha_kernel, num_heads=num_heads, head_dim=d,
                               scaling=scaling, inv_heads=1.0 / num_heads)

    out_nle, attn_w = pl.pallas_call(
        kernel,
        grid=(N, n_l_blocks),
        in_specs=[
            pl.BlockSpec((1, bl, E), batch_l),   # query tile
            pl.BlockSpec((1, S, E), batch0),     # key (full S per batch)
            pl.BlockSpec((1, S, E), batch0),     # value
            pl.BlockSpec((E, E), const2),        # Wq^T   (VMEM-resident, fetched once)
            pl.BlockSpec((E, E), const2),        # Wk^T
            pl.BlockSpec((E, E), const2),        # Wv^T
            pl.BlockSpec((1, E), const2),        # bq
            pl.BlockSpec((1, E), const2),        # bk
            pl.BlockSpec((1, E), const2),        # bv
            pl.BlockSpec((E, E), const2),        # Wo^T
            pl.BlockSpec((1, E), const2),        # bo
        ],
        out_specs=[
            pl.BlockSpec((1, bl, E), batch_l),   # attn output tile
            pl.BlockSpec((1, bl, S), batch_l),   # head-averaged attention weights
        ],
        out_shape=[
            jax.ShapeDtypeStruct((N, L, E), out_dtype),
            jax.ShapeDtypeStruct((N, L, S), jnp.float32),
        ],
        scratch_shapes=[pltpu.VMEM((bl, E), jnp.bfloat16)],
        compiler_params=pltpu.CompilerParams(
            dimension_semantics=("parallel", "parallel")),
    )(q_nle, k_nse, v_nse, wq, wk, wv, bq, bk, bv, wo, bo)

    return jnp.transpose(out_nle, (1, 0, 2)), attn_w


def mha_reference(query, key, value, params, num_heads):
    """Pure-JAX f32 reference matching F.multi_head_attention_forward (no masks, p=0)."""
    L, N, E = query.shape
    S = key.shape[0]
    d = E // num_heads
    w = params["in_proj_weight"]
    b = params["in_proj_bias"]
    scaling = float(d) ** -0.5

    q = (query @ w[:E].T + b[:E]) * scaling                 # [L, N, E]
    k = key @ w[E:2 * E].T + b[E:2 * E]                     # [S, N, E]
    v = value @ w[2 * E:].T + b[2 * E:]                     # [S, N, E]

    q = jnp.transpose(q.reshape(L, N * num_heads, d), (1, 0, 2))   # [N*H, L, d]
    k = jnp.transpose(k.reshape(S, N * num_heads, d), (1, 0, 2))   # [N*H, S, d]
    v = jnp.transpose(v.reshape(S, N * num_heads, d), (1, 0, 2))   # [N*H, S, d]

    scores = jnp.einsum('bld,bsd->bls', q, k)               # [N*H, L, S]
    attn = jax.nn.softmax(scores, axis=-1)
    ctx = jnp.einsum('bls,bsd->bld', attn, v)               # [N*H, L, d]
    ctx = jnp.transpose(ctx, (1, 0, 2)).reshape(L, N, E)    # [L, N, E]

    out = ctx @ params["out_proj_weight"].T + params["out_proj_bias"]
    attn_avg = attn.reshape(N, num_heads, L, S).sum(axis=1) / num_heads
    return out, attn_avg


if __name__ == "__main__":
    # Small shapes consistent with the module: seq=8, batch=2, embed_dim=32, heads=4.
    L, S, N, E, H = 8, 8, 2, 32, 4

    root = jax.random.PRNGKey(0)
    ks = jax.random.split(root, 7)

    def xavier_uniform(k, shape):
        fan_out, fan_in = shape
        bound = math.sqrt(6.0 / (fan_in + fan_out))
        return jax.random.uniform(k, shape, jnp.float32, -bound, bound)

    params = {
        "in_proj_weight": xavier_uniform(ks[0], (3 * E, E)),
        # The module inits biases to 0; use small random biases here so the bias
        # paths of the kernel are actually exercised by the check.
        "in_proj_bias": 0.1 * jax.random.normal(ks[1], (3 * E,), jnp.float32),
        "out_proj_weight": xavier_uniform(ks[2], (E, E)),
        "out_proj_bias": 0.1 * jax.random.normal(ks[3], (E,), jnp.float32),
    }
    query = jax.random.normal(ks[4], (L, N, E), jnp.float32)
    key_in = jax.random.normal(ks[5], (S, N, E), jnp.float32)
    value_in = jax.random.normal(ks[6], (S, N, E), jnp.float32)

    out, attn_w = multihead_attention_forward(query, key_in, value_in, params, H)
    out = jax.block_until_ready(out)
    attn_w = jax.block_until_ready(attn_w)
    assert out.shape == (L, N, E)
    assert attn_w.shape == (N, L, S)

    ref_out, ref_w = mha_reference(query, key_in, value_in, params, H)
    # bf16 MXU path vs f32 reference: slightly relaxed atol on the output.
    np.testing.assert_allclose(np.asarray(out), np.asarray(ref_out),
                               rtol=2e-2, atol=3e-2)
    np.testing.assert_allclose(np.asarray(attn_w), np.asarray(ref_w),
                               rtol=2e-2, atol=2e-2)

    print("KERNEL_OK")
</pallas_src>

<mosaic_0001>
module attributes {stable_mosaic.version = 11 : i64} {
  func.func @_mha_kernel(%arg0: i32, %arg1: i32, %arg2: memref<1x8x32xbf16, #tpu.memory_space<vmem>>, %arg3: memref<1x8x32xbf16, #tpu.memory_space<vmem>>, %arg4: memref<1x8x32xbf16, #tpu.memory_space<vmem>>, %arg5: memref<32x32xbf16, #tpu.memory_space<vmem>>, %arg6: memref<32x32xbf16, #tpu.memory_space<vmem>>, %arg7: memref<32x32xbf16, #tpu.memory_space<vmem>>, %arg8: memref<1x32xf32, #tpu.memory_space<vmem>>, %arg9: memref<1x32xf32, #tpu.memory_space<vmem>>, %arg10: memref<1x32xf32, #tpu.memory_space<vmem>>, %arg11: memref<32x32xbf16, #tpu.memory_space<vmem>>, %arg12: memref<1x32xf32, #tpu.memory_space<vmem>>, %arg13: memref<1x8x32xf32, #tpu.memory_space<vmem>>, %arg14: memref<1x8x8xf32, #tpu.memory_space<vmem>>, %arg15: memref<8x32xbf16, #tpu.memory_space<vmem>>) attributes {dimension_semantics = [#tpu.dimension_semantics<parallel>, #tpu.dimension_semantics<parallel>], iteration_bounds = array<i64: 2, 1>, scalar_prefetch = 0 : i64, scratch_operands = 1 : i64, tpu.core_type = #tpu.core_type<tc>, window_params = [{transform_indices = @transform_0, window_bounds = array<i64: 1, 8, 32>}, {transform_indices = @transform_1, window_bounds = array<i64: 1, 8, 32>}, {transform_indices = @transform_2, window_bounds = array<i64: 1, 8, 32>}, {pipeline_mode = #tpu.pipeline_mode<synchronous>, transform_indices = @transform_3, window_bounds = array<i64: 32, 32>}, {pipeline_mode = #tpu.pipeline_mode<synchronous>, transform_indices = @transform_4, window_bounds = array<i64: 32, 32>}, {pipeline_mode = #tpu.pipeline_mode<synchronous>, transform_indices = @transform_5, window_bounds = array<i64: 32, 32>}, {pipeline_mode = #tpu.pipeline_mode<synchronous>, transform_indices = @transform_6, window_bounds = array<i64: 1, 32>}, {pipeline_mode = #tpu.pipeline_mode<synchronous>, transform_indices = @transform_7, window_bounds = array<i64: 1, 32>}, {pipeline_mode = #tpu.pipeline_mode<synchronous>, transform_indices = @transform_8, window_bounds = array<i64: 1, 32>}, {pipeline_mode = #tpu.pipeline_mode<synchronous>, transform_indices = @transform_9, window_bounds = array<i64: 32, 32>}, {pipeline_mode = #tpu.pipeline_mode<synchronous>, transform_indices = @transform_10, window_bounds = array<i64: 1, 32>}, {transform_indices = @transform_11, window_bounds = array<i64: 1, 8, 32>}, {transform_indices = @transform_12, window_bounds = array<i64: 1, 8, 8>}]} {
    %c0 = arith.constant 0 : index
    %c0_0 = arith.constant 0 : index
    %c0_1 = arith.constant 0 : index
    %0 = vector.load %arg2[%c0, %c0_0, %c0_1] : memref<1x8x32xbf16, #tpu.memory_space<vmem>>, vector<1x8x32xbf16>
    %1 = vector.shape_cast %0 : vector<1x8x32xbf16> to vector<8x32xbf16>
    %c0_2 = arith.constant 0 : index
    %c0_3 = arith.constant 0 : index
    %c0_4 = arith.constant 0 : index
    %2 = vector.load %arg3[%c0_2, %c0_3, %c0_4] : memref<1x8x32xbf16, #tpu.memory_space<vmem>>, vector<1x8x32xbf16>
    %3 = vector.shape_cast %2 : vector<1x8x32xbf16> to vector<8x32xbf16>
    %c0_5 = arith.constant 0 : index
    %c0_6 = arith.constant 0 : index
    %c0_7 = arith.constant 0 : index
    %4 = vector.load %arg4[%c0_5, %c0_6, %c0_7] : memref<1x8x32xbf16, #tpu.memory_space<vmem>>, vector<1x8x32xbf16>
    %5 = vector.shape_cast %4 : vector<1x8x32xbf16> to vector<8x32xbf16>
    %c0_8 = arith.constant 0 : index
    %c0_9 = arith.constant 0 : index
    %6 = vector.load %arg5[%c0_8, %c0_9] : memref<32x32xbf16, #tpu.memory_space<vmem>>, vector<32x32xbf16>
    %cst = arith.constant dense<0.000000e+00> : vector<8x32xf32>
    %7 = tpu.matmul %1, %6, %cst {dimension_numbers = #tpu.dot_dimension_numbers<[1], [0], [0], [1], [0, 0, 1, 1], [], []>} : vector<8x32xbf16>, vector<32x32xbf16>, vector<8x32xf32> -> vector<8x32xf32>
    %c0_10 = arith.constant 0 : index
    %c0_11 = arith.constant 0 : index
    %8 = vector.load %arg8[%c0_10, %c0_11] : memref<1x32xf32, #tpu.memory_space<vmem>>, vector<1x32xf32>
    %9 = vector.broadcast %8 : vector<1x32xf32> to vector<8x32xf32>
    %10 = arith.addf %7, %9 : vector<8x32xf32>
    %cst_12 = arith.constant 0.353553385 : f32
    %11 = vector.broadcast %cst_12 : f32 to vector<8x32xf32>
    %12 = arith.mulf %10, %11 : vector<8x32xf32>
    %c0_13 = arith.constant 0 : index
    %c0_14 = arith.constant 0 : index
    %13 = vector.load %arg6[%c0_13, %c0_14] : memref<32x32xbf16, #tpu.memory_space<vmem>>, vector<32x32xbf16>
    %cst_15 = arith.constant dense<0.000000e+00> : vector<8x32xf32>
    %14 = tpu.matmul %3, %13, %cst_15 {dimension_numbers = #tpu.dot_dimension_numbers<[1], [0], [0], [1], [0, 0, 1, 1], [], []>} : vector<8x32xbf16>, vector<32x32xbf16>, vector<8x32xf32> -> vector<8x32xf32>
    %c0_16 = arith.constant 0 : index
    %c0_17 = arith.constant 0 : index
    %15 = vector.load %arg9[%c0_16, %c0_17] : memref<1x32xf32, #tpu.memory_space<vmem>>, vector<1x32xf32>
    %16 = vector.broadcast %15 : vector<1x32xf32> to vector<8x32xf32>
    %17 = arith.addf %14, %16 : vector<8x32xf32>
    %c0_18 = arith.constant 0 : index
    %c0_19 = arith.constant 0 : index
    %18 = vector.load %arg7[%c0_18, %c0_19] : memref<32x32xbf16, #tpu.memory_space<vmem>>, vector<32x32xbf16>
    %cst_20 = arith.constant dense<0.000000e+00> : vector<8x32xf32>
    %19 = tpu.matmul %5, %18, %cst_20 {dimension_numbers = #tpu.dot_dimension_numbers<[1], [0], [0], [1], [0, 0, 1, 1], [], []>} : vector<8x32xbf16>, vector<32x32xbf16>, vector<8x32xf32> -> vector<8x32xf32>
    %c0_21 = arith.constant 0 : index
    %c0_22 = arith.constant 0 : index
    %20 = vector.load %arg10[%c0_21, %c0_22] : memref<1x32xf32, #tpu.memory_space<vmem>>, vector<1x32xf32>
    %21 = vector.broadcast %20 : vector<1x32xf32> to vector<8x32xf32>
    %22 = arith.addf %19, %21 : vector<8x32xf32>
    %23 = arith.truncf %12 : vector<8x32xf32> to vector<8x32xbf16>
    %24 = arith.truncf %17 : vector<8x32xf32> to vector<8x32xbf16>
    %25 = arith.truncf %22 : vector<8x32xf32> to vector<8x32xbf16>
    %26 = vector.extract_strided_slice %23 {offsets = [0, 0], sizes = [8, 8], strides = [1, 1]} : vector<8x32xbf16> to vector<8x8xbf16>
    %27 = vector.extract_strided_slice %24 {offsets = [0, 0], sizes = [8, 8], strides = [1, 1]} : vector<8x32xbf16> to vector<8x8xbf16>
    %28 = vector.extract_strided_slice %25 {offsets = [0, 0], sizes = [8, 8], strides = [1, 1]} : vector<8x32xbf16> to vector<8x8xbf16>
    "tpu.trace_start"() <{level = 10 : i32, message = "ld,sd->ls"}> : () -> ()
    %cst_23 = arith.constant dense<0.000000e+00> : vector<8x8xf32>
    %29 = tpu.matmul %26, %27, %cst_23 {dimension_numbers = #tpu.dot_dimension_numbers<[1], [1], [0], [0], [0, 0, 1, 0], [], []>} : vector<8x8xbf16>, vector<8x8xbf16>, vector<8x8xf32> -> vector<8x8xf32>
    "tpu.trace_stop"() : () -> ()
    %cst_24 = arith.constant dense<0xFF800000> : vector<8xf32>
    %30 = vector.multi_reduction <maximumf>, %29, %cst_24 [1] : vector<8x8xf32> to vector<8xf32>
    %31 = vector.shape_cast %30 : vector<8xf32> to vector<8x1xf32>
    %32 = vector.broadcast %31 : vector<8x1xf32> to vector<8x8xf32>
    %33 = arith.subf %29, %32 : vector<8x8xf32>
    %34 = math.exp %33 : vector<8x8xf32>
    %cst_25 = arith.constant dense<0.000000e+00> : vector<8xf32>
    %35 = vector.multi_reduction <add>, %34, %cst_25 [1] : vector<8x8xf32> to vector<8xf32>
    %36 = vector.shape_cast %35 : vector<8xf32> to vector<8x1xf32>
    %37 = tpu.reciprocal %36 {approx = true} : vector<8x1xf32> -> vector<8x1xf32>
    %38 = vector.broadcast %37 : vector<8x1xf32> to vector<8x8xf32>
    %39 = arith.mulf %34, %38 : vector<8x8xf32>
    %40 = arith.truncf %39 : vector<8x8xf32> to vector<8x8xbf16>
    %cst_26 = arith.constant dense<0.000000e+00> : vector<8x8xf32>
    %41 = tpu.matmul %40, %28, %cst_26 {dimension_numbers = #tpu.dot_dimension_numbers<[1], [0], [0], [1], [0, 0, 1, 1], [], []>} : vector<8x8xbf16>, vector<8x8xbf16>, vector<8x8xf32> -> vector<8x8xf32>
    %42 = arith.truncf %41 : vector<8x8xf32> to vector<8x8xbf16>
    %c0_27 = arith.constant 0 : index
    %c0_28 = arith.constant 0 : index
    %43 = vector.load %arg15[%c0_27, %c0_28] : memref<8x32xbf16, #tpu.memory_space<vmem>>, vector<8x8xbf16>
    tpu.vector_store %arg15[%c0_27, %c0_28], %42 {strides = array<i32>} : memref<8x32xbf16, #tpu.memory_space<vmem>>, vector<8x8xbf16>,
    %44 = vector.extract_strided_slice %23 {offsets = [0, 8], sizes = [8, 8], strides = [1, 1]} : vector<8x32xbf16> to vector<8x8xbf16>
    %45 = vector.extract_strided_slice %24 {offsets = [0, 8], sizes = [8, 8], strides = [1, 1]} : vector<8x32xbf16> to vector<8x8xbf16>
    %46 = vector.extract_strided_slice %25 {offsets = [0, 8], sizes = [8, 8], strides = [1, 1]} : vector<8x32xbf16> to vector<8x8xbf16>
    "tpu.trace_start"() <{level = 10 : i32, message = "ld,sd->ls"}> : () -> ()
    %cst_29 = arith.constant dense<0.000000e+00> : vector<8x8xf32>
    %47 = tpu.matmul %44, %45, %cst_29 {dimension_numbers = #tpu.dot_dimension_numbers<[1], [1], [0], [0], [0, 0, 1, 0], [], []>} : vector<8x8xbf16>, vector<8x8xbf16>, vector<8x8xf32> -> vector<8x8xf32>
    "tpu.trace_stop"() : () -> ()
    %cst_30 = arith.constant dense<0xFF800000> : vector<8xf32>
    %48 = vector.multi_reduction <maximumf>, %47, %cst_30 [1] : vector<8x8xf32> to vector<8xf32>
    %49 = vector.shape_cast %48 : vector<8xf32> to vector<8x1xf32>
    %50 = vector.broadcast %49 : vector<8x1xf32> to vector<8x8xf32>
    %51 = arith.subf %47, %50 : vector<8x8xf32>
    %52 = math.exp %51 : vector<8x8xf32>
    %cst_31 = arith.constant dense<0.000000e+00> : vector<8xf32>
    %53 = vector.multi_reduction <add>, %52, %cst_31 [1] : vector<8x8xf32> to vector<8xf32>
    %54 = vector.shape_cast %53 : vector<8xf32> to vector<8x1xf32>
    %55 = tpu.reciprocal %54 {approx = true} : vector<8x1xf32> -> vector<8x1xf32>
    %56 = vector.broadcast %55 : vector<8x1xf32> to vector<8x8xf32>
    %57 = arith.mulf %52, %56 : vector<8x8xf32>
    %58 = arith.truncf %57 : vector<8x8xf32> to vector<8x8xbf16>
    %cst_32 = arith.constant dense<0.000000e+00> : vector<8x8xf32>
    %59 = tpu.matmul %58, %46, %cst_32 {dimension_numbers = #tpu.dot_dimension_numbers<[1], [0], [0], [1], [0, 0, 1, 1], [], []>} : vector<8x8xbf16>, vector<8x8xbf16>, vector<8x8xf32> -> vector<8x8xf32>
    %60 = arith.truncf %59 : vector<8x8xf32> to vector<8x8xbf16>
    %c0_33 = arith.constant 0 : index
    %c8 = arith.constant 8 : index
    %61 = vector.load %arg15[%c0_33, %c8] : memref<8x32xbf16, #tpu.memory_space<vmem>>, vector<8x8xbf16>
    tpu.vector_store %arg15[%c0_33, %c8], %60 {strides = array<i32>} : memref<8x32xbf16, #tpu.memory_space<vmem>>, vector<8x8xbf16>,
    %62 = arith.addf %39, %57 : vector<8x8xf32>
    %63 = vector.extract_strided_slice %23 {offsets = [0, 16], sizes = [8, 8], strides = [1, 1]} : vector<8x32xbf16> to vector<8x8xbf16>
    %64 = vector.extract_strided_slice %24 {offsets = [0, 16], sizes = [8, 8], strides = [1, 1]} : vector<8x32xbf16> to vector<8x8xbf16>
    %65 = vector.extract_strided_slice %25 {offsets = [0, 16], sizes = [8, 8], strides = [1, 1]} : vector<8x32xbf16> to vector<8x8xbf16>
    "tpu.trace_start"() <{level = 10 : i32, message = "ld,sd->ls"}> : () -> ()
    %cst_34 = arith.constant dense<0.000000e+00> : vector<8x8xf32>
    %66 = tpu.matmul %63, %64, %cst_34 {dimension_numbers = #tpu.dot_dimension_numbers<[1], [1], [0], [0], [0, 0, 1, 0], [], []>} : vector<8x8xbf16>, vector<8x8xbf16>, vector<8x8xf32> -> vector<8x8xf32>
    "tpu.trace_stop"() : () -> ()
    %cst_35 = arith.constant dense<0xFF800000> : vector<8xf32>
    %67 = vector.multi_reduction <maximumf>, %66, %cst_35 [1] : vector<8x8xf32> to vector<8xf32>
    %68 = vector.shape_cast %67 : vector<8xf32> to vector<8x1xf32>
    %69 = vector.broadcast %68 : vector<8x1xf32> to vector<8x8xf32>
    %70 = arith.subf %66, %69 : vector<8x8xf32>
    %71 = math.exp %70 : vector<8x8xf32>
    %cst_36 = arith.constant dense<0.000000e+00> : vector<8xf32>
    %72 = vector.multi_reduction <add>, %71, %cst_36 [1] : vector<8x8xf32> to vector<8xf32>
    %73 = vector.shape_cast %72 : vector<8xf32> to vector<8x1xf32>
    %74 = tpu.reciprocal %73 {approx = true} : vector<8x1xf32> -> vector<8x1xf32>
    %75 = vector.broadcast %74 : vector<8x1xf32> to vector<8x8xf32>
    %76 = arith.mulf %71, %75 : vector<8x8xf32>
    %77 = arith.truncf %76 : vector<8x8xf32> to vector<8x8xbf16>
    %cst_37 = arith.constant dense<0.000000e+00> : vector<8x8xf32>
    %78 = tpu.matmul %77, %65, %cst_37 {dimension_numbers = #tpu.dot_dimension_numbers<[1], [0], [0], [1], [0, 0, 1, 1], [], []>} : vector<8x8xbf16>, vector<8x8xbf16>, vector<8x8xf32> -> vector<8x8xf32>
    %79 = arith.truncf %78 : vector<8x8xf32> to vector<8x8xbf16>
    %c0_38 = arith.constant 0 : index
    %c16 = arith.constant 16 : index
    %80 = vector.load %arg15[%c0_38, %c16] : memref<8x32xbf16, #tpu.memory_space<vmem>>, vector<8x8xbf16>
    tpu.vector_store %arg15[%c0_38, %c16], %79 {strides = array<i32>} : memref<8x32xbf16, #tpu.memory_space<vmem>>, vector<8x8xbf16>,
    %81 = arith.addf %62, %76 : vector<8x8xf32>
    %82 = vector.extract_strided_slice %23 {offsets = [0, 24], sizes = [8, 8], strides = [1, 1]} : vector<8x32xbf16> to vector<8x8xbf16>
    %83 = vector.extract_strided_slice %24 {offsets = [0, 24], sizes = [8, 8], strides = [1, 1]} : vector<8x32xbf16> to vector<8x8xbf16>
    %84 = vector.extract_strided_slice %25 {offsets = [0, 24], sizes = [8, 8], strides = [1, 1]} : vector<8x32xbf16> to vector<8x8xbf16>
    "tpu.trace_start"() <{level = 10 : i32, message = "ld,sd->ls"}> : () -> ()
    %cst_39 = arith.constant dense<0.000000e+00> : vector<8x8xf32>
    %85 = tpu.matmul %82, %83, %cst_39 {dimension_numbers = #tpu.dot_dimension_numbers<[1], [1], [0], [0], [0, 0, 1, 0], [], []>} : vector<8x8xbf16>, vector<8x8xbf16>, vector<8x8xf32> -> vector<8x8xf32>
    "tpu.trace_stop"() : () -> ()
    %cst_40 = arith.constant dense<0xFF800000> : vector<8xf32>
    %86 = vector.multi_reduction <maximumf>, %85, %cst_40 [1] : vector<8x8xf32> to vector<8xf32>
    %87 = vector.shape_cast %86 : vector<8xf32> to vector<8x1xf32>
    %88 = vector.broadcast %87 : vector<8x1xf32> to vector<8x8xf32>
    %89 = arith.subf %85, %88 : vector<8x8xf32>
    %90 = math.exp %89 : vector<8x8xf32>
    %cst_41 = arith.constant dense<0.000000e+00> : vector<8xf32>
    %91 = vector.multi_reduction <add>, %90, %cst_41 [1] : vector<8x8xf32> to vector<8xf32>
    %92 = vector.shape_cast %91 : vector<8xf32> to vector<8x1xf32>
    %93 = tpu.reciprocal %92 {approx = true} : vector<8x1xf32> -> vector<8x1xf32>
    %94 = vector.broadcast %93 : vector<8x1xf32> to vector<8x8xf32>
    %95 = arith.mulf %90, %94 : vector<8x8xf32>
    %96 = arith.truncf %95 : vector<8x8xf32> to vector<8x8xbf16>
    %cst_42 = arith.constant dense<0.000000e+00> : vector<8x8xf32>
    %97 = tpu.matmul %96, %84, %cst_42 {dimension_numbers = #tpu.dot_dimension_numbers<[1], [0], [0], [1], [0, 0, 1, 1], [], []>} : vector<8x8xbf16>, vector<8x8xbf16>, vector<8x8xf32> -> vector<8x8xf32>
    %98 = arith.truncf %97 : vector<8x8xf32> to vector<8x8xbf16>
    %c0_43 = arith.constant 0 : index
    %c24 = arith.constant 24 : index
    %99 = vector.load %arg15[%c0_43, %c24] : memref<8x32xbf16, #tpu.memory_space<vmem>>, vector<8x8xbf16>
    tpu.vector_store %arg15[%c0_43, %c24], %98 {strides = array<i32>} : memref<8x32xbf16, #tpu.memory_space<vmem>>, vector<8x8xbf16>,
    %100 = arith.addf %81, %95 : vector<8x8xf32>
    %c0_44 = arith.constant 0 : index
    %c0_45 = arith.constant 0 : index
    %101 = vector.load %arg15[%c0_44, %c0_45] : memref<8x32xbf16, #tpu.memory_space<vmem>>, vector<8x32xbf16>
    %c0_46 = arith.constant 0 : index
    %c0_47 = arith.constant 0 : index
    %102 = vector.load %arg11[%c0_46, %c0_47] : memref<32x32xbf16, #tpu.memory_space<vmem>>, vector<32x32xbf16>
    %cst_48 = arith.constant dense<0.000000e+00> : vector<8x32xf32>
    %103 = tpu.matmul %101, %102, %cst_48 {dimension_numbers = #tpu.dot_dimension_numbers<[1], [0], [0], [1], [0, 0, 1, 1], [], []>} : vector<8x32xbf16>, vector<32x32xbf16>, vector<8x32xf32> -> vector<8x32xf32>
    %c0_49 = arith.constant 0 : index
    %c0_50 = arith.constant 0 : index
    %104 = vector.load %arg12[%c0_49, %c0_50] : memref<1x32xf32, #tpu.memory_space<vmem>>, vector<1x32xf32>
    %105 = vector.broadcast %104 : vector<1x32xf32> to vector<8x32xf32>
    %106 = arith.addf %103, %105 : vector<8x32xf32>
    %c0_51 = arith.constant 0 : index
    %c0_52 = arith.constant 0 : index
    %c0_53 = arith.constant 0 : index
    %107 = vector.load %arg13[%c0_51, %c0_52, %c0_53] : memref<1x8x32xf32, #tpu.memory_space<vmem>>, vector<1x8x32xf32>
    %108 = vector.shape_cast %107 : vector<1x8x32xf32> to vector<8x32xf32>
    %109 = vector.shape_cast %106 : vector<8x32xf32> to vector<1x8x32xf32>
    tpu.vector_store %arg13[%c0_51, %c0_52, %c0_53], %109 {strides = array<i32>} : memref<1x8x32xf32, #tpu.memory_space<vmem>>, vector<1x8x32xf32>,
    %cst_54 = arith.constant 2.500000e-01 : f32
    %110 = vector.broadcast %cst_54 : f32 to vector<8x8xf32>
    %111 = arith.mulf %100, %110 : vector<8x8xf32>
    %c0_55 = arith.constant 0 : index
    %c0_56 = arith.constant 0 : index
    %c0_57 = arith.constant 0 : index
    %112 = vector.load %arg14[%c0_55, %c0_56, %c0_57] : memref<1x8x8xf32, #tpu.memory_space<vmem>>, vector<1x8x8xf32>
    %113 = vector.shape_cast %112 : vector<1x8x8xf32> to vector<8x8xf32>
    %114 = vector.shape_cast %111 : vector<8x8xf32> to vector<1x8x8xf32>
    tpu.vector_store %arg14[%c0_55, %c0_56, %c0_57], %114 {strides = array<i32>} : memref<1x8x8xf32, #tpu.memory_space<vmem>>, vector<1x8x8xf32>,
    return
  }
  func.func @transform_0(%arg0: i32, %arg1: i32) -> (i32, i32, i32) {
    %c0_i32 = arith.constant 0 : i32
    %c0_i32_0 = arith.constant 0 : i32
    return %arg0, %arg1, %c0_i32 : i32, i32, i32
  }
  func.func @transform_1(%arg0: i32, %arg1: i32) -> (i32, i32, i32) {
    %c0_i32 = arith.constant 0 : i32
    %c0_i32_0 = arith.constant 0 : i32
    %c0_i32_1 = arith.constant 0 : i32
    return %arg0, %c0_i32, %c0_i32_0 : i32, i32, i32
  }
  func.func @transform_2(%arg0: i32, %arg1: i32) -> (i32, i32, i32) {
    %c0_i32 = arith.constant 0 : i32
    %c0_i32_0 = arith.constant 0 : i32
    %c0_i32_1 = arith.constant 0 : i32
    return %arg0, %c0_i32, %c0_i32_0 : i32, i32, i32
  }
  func.func @transform_3(%arg0: i32, %arg1: i32) -> (i32, i32) {
    %c0_i32 = arith.constant 0 : i32
    %c0_i32_0 = arith.constant 0 : i32
    %c0_i32_1 = arith.constant 0 : i32
    return %c0_i32, %c0_i32_0 : i32, i32
  }
  func.func @transform_4(%arg0: i32, %arg1: i32) -> (i32, i32) {
    %c0_i32 = arith.constant 0 : i32
    %c0_i32_0 = arith.constant 0 : i32
    %c0_i32_1 = arith.constant 0 : i32
    return %c0_i32, %c0_i32_0 : i32, i32
  }
  func.func @transform_5(%arg0: i32, %arg1: i32) -> (i32, i32) {
    %c0_i32 = arith.constant 0 : i32
    %c0_i32_0 = arith.constant 0 : i32
    %c0_i32_1 = arith.constant 0 : i32
    return %c0_i32, %c0_i32_0 : i32, i32
  }
  func.func @transform_6(%arg0: i32, %arg1: i32) -> (i32, i32) {
    %c0_i32 = arith.constant 0 : i32
    %c0_i32_0 = arith.constant 0 : i32
    %c0_i32_1 = arith.constant 0 : i32
    return %c0_i32, %c0_i32_0 : i32, i32
  }
  func.func @transform_7(%arg0: i32, %arg1: i32) -> (i32, i32) {
    %c0_i32 = arith.constant 0 : i32
    %c0_i32_0 = arith.constant 0 : i32
    %c0_i32_1 = arith.constant 0 : i32
    return %c0_i32, %c0_i32_0 : i32, i32
  }
  func.func @transform_8(%arg0: i32, %arg1: i32) -> (i32, i32) {
    %c0_i32 = arith.constant 0 : i32
    %c0_i32_0 = arith.constant 0 : i32
    %c0_i32_1 = arith.constant 0 : i32
    return %c0_i32, %c0_i32_0 : i32, i32
  }
  func.func @transform_9(%arg0: i32, %arg1: i32) -> (i32, i32) {
    %c0_i32 = arith.constant 0 : i32
    %c0_i32_0 = arith.constant 0 : i32
    %c0_i32_1 = arith.constant 0 : i32
    return %c0_i32, %c0_i32_0 : i32, i32
  }
  func.func @transform_10(%arg0: i32, %arg1: i32) -> (i32, i32) {
    %c0_i32 = arith.constant 0 : i32
    %c0_i32_0 = arith.constant 0 : i32
    %c0_i32_1 = arith.constant 0 : i32
    return %c0_i32, %c0_i32_0 : i32, i32
  }
  func.func @transform_11(%arg0: i32, %arg1: i32) -> (i32, i32, i32) {
    %c0_i32 = arith.constant 0 : i32
    %c0_i32_0 = arith.constant 0 : i32
    return %arg0, %arg1, %c0_i32 : i32, i32, i32
  }
  func.func @transform_12(%arg0: i32, %arg1: i32) -> (i32, i32, i32) {
    %c0_i32 = arith.constant 0 : i32
    %c0_i32_0 = arith.constant 0 : i32
    return %arg0, %arg1, %c0_i32 : i32, i32, i32
  }
}

</mosaic_0001>

<llo_original>
// kernel: tpu_custom_call.1
$region0: #{tpu_custom_call.1}
  #allocation0 [shape = 'u32[]', space=smem, size = 0x4, offset = 0x4, fixed_abs, tag = 'smem constant byte address 0x4 - core index']
  #allocation1 [shape = 'u32[144,128]{1,0:T(1,128)}', space=vmem, size = 0x12000, scoped, tag = 'internal scratch']
  #allocation2 [shape = 'bf16[8,32]{1,0:T(8,128)(2,1)}', space=vmem, size = 0x800, scoped, tag = 'scratch operand']
  %s0 = inlined_call_operand.hbm [shape: bf16[2,8,32], index: 0, kind: input, shape index: {}]
  %s1 = inlined_call_operand.hbm [shape: bf16[2,8,32], index: 1, kind: input, shape index: {}]
  %s2 = inlined_call_operand.hbm [shape: bf16[2,8,32], index: 2, kind: input, shape index: {}]
  %s3 = inlined_call_operand.hbm [shape: bf16[32,32], index: 3, kind: input, shape index: {}]
  %s4 = inlined_call_operand.hbm [shape: bf16[32,32], index: 4, kind: input, shape index: {}]
  %s5 = inlined_call_operand.vmem [shape: bf16[32,32], index: 5, kind: input, shape index: {}]
  %s6 = inlined_call_operand.vmem [shape: f32[1,32], index: 6, kind: input, shape index: {}]
  %s7 = inlined_call_operand.vmem [shape: f32[1,32], index: 7, kind: input, shape index: {}]
  %s8 = inlined_call_operand.hbm [shape: f32[1,32], index: 8, kind: input, shape index: {}]
  %s9 = inlined_call_operand.vmem [shape: bf16[32,32], index: 9, kind: input, shape index: {}]
  %s10 = inlined_call_operand.vmem [shape: f32[1,32], index: 10, kind: input, shape index: {}]
  %s11 = inlined_call_operand.hbm [shape: f32[2,8,32], index: 11, kind: output, shape index: {0}]
  %s12 = inlined_call_operand.hbm [shape: f32[2,8,8], index: 12, kind: output, shape index: {1}]
  %13 = xla_tuple %s11, %s12
  %s14 = sld [smem:[#allocation0]]
  $region109: #{tpu_custom_call.1} parent=0
    _
  %s16 = ssub.s32 1, %s14
  %s17 = scalar_select 0, %s16, %s14
  $region1: #{tpu_custom_call.1} parent=0
    #allocation3 [shape = 'u8[4096]{0}', space=vmem, size = 0x1000, scoped, tag = 'input window, operand 0']
    #allocation4 [shape = 's32[2]{0}', space=sflag, size = 0x8, scoped, tag = 'scoped memory for tpu_custom_call.1']
    #allocation5 [shape = 's32[2]{0}', space=sflag, size = 0x8, scoped, tag = 'scoped memory for tpu_custom_call.1']
    #allocation6 [shape = 'u8[4096]{0}', space=vmem, size = 0x1000, scoped, tag = 'input window, operand 1']
    #allocation7 [shape = 's32[2]{0}', space=sflag, size = 0x8, scoped, tag = 'scoped memory for tpu_custom_call.1']
    #allocation8 [shape = 'u8[4096]{0}', space=vmem, size = 0x1000, scoped, tag = 'input window, operand 2']
    #allocation9 [shape = 'u8[8192]{0}', space=vmem, size = 0x2000, scoped, tag = 'input window, operand 3, single buffered']
    #allocation10 [shape = 's32[1]{0}', space=sflag, size = 0x4, scoped, tag = 'scoped memory for tpu_custom_call.1']
    #allocation11 [shape = 'u8[8192]{0}', space=vmem, size = 0x2000, scoped, tag = 'input window, operand 4, single buffered']
    #allocation12 [shape = 'u8[512]{0}', space=vmem, size = 0x400, scoped, tag = 'input window, operand 8, single buffered']
    #allocation13 [shape = 's32[1]{0}', space=sflag, size = 0x4, scoped, tag = 'scoped memory for tpu_custom_call.1']
    #allocation14 [shape = 'u8[8192]{0}', space=vmem, size = 0x2000, scoped, tag = 'output window, operand 0']
    #allocation15 [shape = 'u8[8192]{0}', space=vmem, size = 0x2000, scoped, tag = 'output window, operand 1']
    #allocation16 [shape = 's32[2]{0}', space=sflag, size = 0x8, scoped, tag = 'scoped memory for tpu_custom_call.1']
    %18 = vsyncpa [#allocation4], 0
    %s19 = scalar_lea.sflag [#allocation4], 1
    %20 = vsyncpa %s19, 0
    %21 = vsyncpa [#allocation7], 0
    %s22 = scalar_lea.sflag [#allocation7], 1
    %23 = vsyncpa %s22, 0
    %24 = vsyncpa [#allocation10], 0
    %25 = vsyncpa [#allocation13], 0
    %26 = vsyncpa [#allocation5], 0
    %s27 = scalar_lea.sflag [#allocation5], 1
    %28 = vsyncpa %s27, 0
    %29 = vsyncpa [#allocation16], 0
    %s30 = scalar_lea.sflag [#allocation16], 1
    %31 = vsyncpa %s30, 0
    loop: start=0, step=1, limit=4
    $region2: #{tpu_custom_call.1} parent=1 // loop_pre_header
      _
    $region3: #{tpu_custom_call.1} parent=1 // loop_header
      %s33 = sphi 0, %s37
      %p34 = scmp.ge.s32.totalorder %s33, 4
      %s40 = sphi 0, %s52
      %s41 = sphi 0, %s48
      %s42 = sphi 0, %s40
      %s43 = sphi 0, %s41
      %s44 = sphi 0, %s42
      %s45 = sphi 0, %s43
      %s57 = sphi 0, %s59
      %s60 = sphi 0, %s57
      %s61 = sphi 0, %s60
      %s77 = sphi 0, %s61
      %s83 = sphi 0, %s85
      %s86 = sphi 0, %s83
      %s87 = sphi 0, %s86
      %s103 = sphi 0, %s87
      %s109 = sphi 0, %s111
      %s112 = sphi 0, %s109
      %s113 = sphi 0, %s112
      %s129 = sphi 0, %s113
      %s133 = sphi 0, %s133
      %s135 = sphi 0, %s133
      %s136 = sphi 0, %s135
      %s150 = sphi 0, %s136
      %s154 = sphi 0, %s154
      %s156 = sphi 0, %s154
      %s157 = sphi 0, %s156
      %s171 = sphi 0, %s157
      %s175 = sphi 0, %s175
      %s177 = sphi 0, %s175
      %s178 = sphi 0, %s177
      %s192 = sphi 0, %s178
      %s196 = sphi 0, %s196
      %s198 = sphi 0, %s196
      %s199 = sphi 0, %s198
      %s213 = sphi 0, %s199
      %s217 = sphi 0, %s217
      %s219 = sphi 0, %s217
      %s220 = sphi 0, %s219
      %s234 = sphi 0, %s220
      %s238 = sphi 0, %s238
      %s240 = sphi 0, %s238
      %s241 = sphi 0, %s240
      %s255 = sphi 0, %s241
      %s259 = sphi 0, %s259
      %s261 = sphi 0, %s259
      %s262 = sphi 0, %s261
      %s276 = sphi 0, %s262
      %s280 = sphi 0, %s280
      %s282 = sphi 0, %s280
      %s283 = sphi 0, %s282
      %s297 = sphi 0, %s283
      %s305 = sphi 0, %s307
      %s308 = sphi 0, %s305
      %s309 = sphi 0, %s308
      %s325 = sphi 0, %s309
      %s333 = sphi 0, %s335
      %s336 = sphi 0, %s333
      %s337 = sphi 0, %s336
      %s353 = sphi 0, %s337
    $region4: #{tpu_custom_call.1} parent=1 // loop_header_branch
      %36 = sbr.rel (%p34) target = $region8
    $region5: #{tpu_custom_call.1} parent=1 // loop_body
      %s38 = ssub.s32 %s33, 1
      %s39 = ssub.s32 %s33, 2
      %s46 = sadd.s32 1, %s41
      %p47 = scmp.ge.s32.totalorder %s46, 1
      %s48 = scalar_select %p47, 0, %s46
      %s49 = sadd.s32 1, %s40
      %s50 = scalar_select %p47, %s49, %s40
      %p51 = scmp.ge.s32.totalorder %s50, 2
      %s52 = scalar_select %p51, 0, %s50
      %s53 = ssub.s32 %s40, %s52
      %s54 = ssub.s32 %s41, %s48
      %s55 = sor.u32 %s53, %s54
      %p56 = scmp.eq.s32.totalorder %s55, 0
      %s58 = sadd.s32 %s57, 1
      %s59 = scalar_select %p56, %s57, %s58
      %p62 = pneg %p56
      %p63 = scmp.eq.s32.totalorder %s33, 1
      %p64 = por %p62, %p63
      %p65 = scmp.ne.s32.totalorder %s57, %s60
      %p66 = scmp.eq.s32.totalorder %s33, 0
      %p67 = por %p65, %p66
      %p68 = scmp.ne.s32.totalorder %s57, %s60
      %p69 = scmp.eq.s32.totalorder %s38, 1
      %p70 = por %p68, %p69
      %p71 = scmp.ne.s32.totalorder %s60, %s61
      %p72 = scmp.eq.s32.totalorder %s38, 0
      %p73 = por %p71, %p72
      %p74 = scmp.ne.s32.totalorder %s60, %s61
      %p75 = scmp.eq.s32.totalorder %s39, 1
      %p76 = por %p74, %p75
      %p78 = scmp.ne.s32.totalorder %s61, %s77
      %p79 = scmp.eq.s32.totalorder %s39, 0
      %p80 = por %p78, %p79
      %s81 = ssub.s32 %s40, %s52
      %p82 = scmp.eq.s32.totalorder %s81, 0
      %s84 = sadd.s32 %s83, 1
      %s85 = scalar_select %p82, %s83, %s84
      %p88 = pneg %p82
      %p89 = scmp.eq.s32.totalorder %s33, 1
      %p90 = por %p88, %p89
      %p91 = scmp.ne.s32.totalorder %s83, %s86
      %p92 = scmp.eq.s32.totalorder %s33, 0
      %p93 = por %p91, %p92
      %p94 = scmp.ne.s32.totalorder %s83, %s86
      %p95 = scmp.eq.s32.totalorder %s38, 1
      %p96 = por %p94, %p95
      %p97 = scmp.ne.s32.totalorder %s86, %s87
      %p98 = scmp.eq.s32.totalorder %s38, 0
      %p99 = por %p97, %p98
      %p100 = scmp.ne.s32.totalorder %s86, %s87
      %p101 = scmp.eq.s32.totalorder %s39, 1
      %p102 = por %p100, %p101
      %p104 = scmp.ne.s32.totalorder %s87, %s103
      %p105 = scmp.eq.s32.totalorder %s39, 0
      %p106 = por %p104, %p105
      %s107 = ssub.s32 %s40, %s52
      %p108 = scmp.eq.s32.totalorder %s107, 0
      %s110 = sadd.s32 %s109, 1
      %s111 = scalar_select %p108, %s109, %s110
      %p114 = pneg %p108
      %p115 = scmp.eq.s32.totalorder %s33, 1
      %p116 = por %p114, %p115
      %p117 = scmp.ne.s32.totalorder %s109, %s112
      %p118 = scmp.eq.s32.totalorder %s33, 0
      %p119 = por %p117, %p118
      %p120 = scmp.ne.s32.totalorder %s109, %s112
      %p121 = scmp.eq.s32.totalorder %s38, 1
      %p122 = por %p120, %p121
      %p123 = scmp.ne.s32.totalorder %s112, %s113
      %p124 = scmp.eq.s32.totalorder %s38, 0
      %p125 = por %p123, %p124
      %p126 = scmp.ne.s32.totalorder %s112, %s113
      %p127 = scmp.eq.s32.totalorder %s39, 1
      %p128 = por %p126, %p127
      %p130 = scmp.ne.s32.totalorder %s113, %s129
      %p131 = scmp.eq.s32.totalorder %s39, 0
      %p132 = por %p130, %p131
      %s134 = sadd.s32 %s133, 1
      %p137 = scmp.eq.s32.totalorder %s33, 1
      %p138 = scmp.ne.s32.totalorder %s133, %s135
      %p139 = scmp.eq.s32.totalorder %s33, 0
      %p140 = por %p138, %p139
      %p141 = scmp.ne.s32.totalorder %s133, %s135
      %p142 = scmp.eq.s32.totalorder %s38, 1
      %p143 = por %p141, %p142
      %p144 = scmp.ne.s32.totalorder %s135, %s136
      %p145 = scmp.eq.s32.totalorder %s38, 0
      %p146 = por %p144, %p145
      %p147 = scmp.ne.s32.totalorder %s135, %s136
      %p148 = scmp.eq.s32.totalorder %s39, 1
      %p149 = por %p147, %p148
      %p151 = scmp.ne.s32.totalorder %s136, %s150
      %p152 = scmp.eq.s32.totalorder %s39, 0
      %p153 = por %p151, %p152
      %s155 = sadd.s32 %s154, 1
      %p158 = scmp.eq.s32.totalorder %s33, 1
      %p159 = scmp.ne.s32.totalorder %s154, %s156
      %p160 = scmp.eq.s32.totalorder %s33, 0
      %p161 = por %p159, %p160
      %p162 = scmp.ne.s32.totalorder %s154, %s156
      %p163 = scmp.eq.s32.totalorder %s38, 1
      %p164 = por %p162, %p163
      %p165 = scmp.ne.s32.totalorder %s156, %s157
      %p166 = scmp.eq.s32.totalorder %s38, 0
      %p167 = por %p165, %p166
      %p168 = scmp.ne.s32.totalorder %s156, %s157
      %p169 = scmp.eq.s32.totalorder %s39, 1
      %p170 = por %p168, %p169
      %p172 = scmp.ne.s32.totalorder %s157, %s171
      %p173 = scmp.eq.s32.totalorder %s39, 0
      %p174 = por %p172, %p173
      %s176 = sadd.s32 %s175, 1
      %p179 = scmp.eq.s32.totalorder %s33, 1
      %p180 = scmp.ne.s32.totalorder %s175, %s177
      %p181 = scmp.eq.s32.totalorder %s33, 0
      %p182 = por %p180, %p181
      %p183 = scmp.ne.s32.totalorder %s175, %s177
      %p184 = scmp.eq.s32.totalorder %s38, 1
      %p185 = por %p183, %p184
      %p186 = scmp.ne.s32.totalorder %s177, %s178
      %p187 = scmp.eq.s32.totalorder %s38, 0
      %p188 = por %p186, %p187
      %p189 = scmp.ne.s32.totalorder %s177, %s178
      %p190 = scmp.eq.s32.totalorder %s39, 1
      %p191 = por %p189, %p190
      %p193 = scmp.ne.s32.totalorder %s178, %s192
      %p194 = scmp.eq.s32.totalorder %s39, 0
      %p195 = por %p193, %p194
      %s197 = sadd.s32 %s196, 1
      %p200 = scmp.eq.s32.totalorder %s33, 1
      %p201 = scmp.ne.s32.totalorder %s196, %s198
      %p202 = scmp.eq.s32.totalorder %s33, 0
      %p203 = por %p201, %p202
      %p204 = scmp.ne.s32.totalorder %s196, %s198
      %p205 = scmp.eq.s32.totalorder %s38, 1
      %p206 = por %p204, %p205
      %p207 = scmp.ne.s32.totalorder %s198, %s199
      %p208 = scmp.eq.s32.totalorder %s38, 0
      %p209 = por %p207, %p208
      %p210 = scmp.ne.s32.totalorder %s198, %s199
      %p211 = scmp.eq.s32.totalorder %s39, 1
      %p212 = por %p210, %p211
      %p214 = scmp.ne.s32.totalorder %s199, %s213
      %p215 = scmp.eq.s32.totalorder %s39, 0
      %p216 = por %p214, %p215
      %s218 = sadd.s32 %s217, 1
      %p221 = scmp.eq.s32.totalorder %s33, 1
      %p222 = scmp.ne.s32.totalorder %s217, %s219
      %p223 = scmp.eq.s32.totalorder %s33, 0
      %p224 = por %p222, %p223
      %p225 = scmp.ne.s32.totalorder %s217, %s219
      %p226 = scmp.eq.s32.totalorder %s38, 1
      %p227 = por %p225, %p226
      %p228 = scmp.ne.s32.totalorder %s219, %s220
      %p229 = scmp.eq.s32.totalorder %s38, 0
      %p230 = por %p228, %p229
      %p231 = scmp.ne.s32.totalorder %s219, %s220
      %p232 = scmp.eq.s32.totalorder %s39, 1
      %p233 = por %p231, %p232
      %p235 = scmp.ne.s32.totalorder %s220, %s234
      %p236 = scmp.eq.s32.totalorder %s39, 0
      %p237 = por %p235, %p236
      %s239 = sadd.s32 %s238, 1
      %p242 = scmp.eq.s32.totalorder %s33, 1
      %p243 = scmp.ne.s32.totalorder %s238, %s240
      %p244 = scmp.eq.s32.totalorder %s33, 0
      %p245 = por %p243, %p244
      %p246 = scmp.ne.s32.totalorder %s238, %s240
      %p247 = scmp.eq.s32.totalorder %s38, 1
      %p248 = por %p246, %p247
      %p249 = scmp.ne.s32.totalorder %s240, %s241
      %p250 = scmp.eq.s32.totalorder %s38, 0
      %p251 = por %p249, %p250
      %p252 = scmp.ne.s32.totalorder %s240, %s241
      %p253 = scmp.eq.s32.totalorder %s39, 1
      %p254 = por %p252, %p253
      %p256 = scmp.ne.s32.totalorder %s241, %s255
      %p257 = scmp.eq.s32.totalorder %s39, 0
      %p258 = por %p256, %p257
      %s260 = sadd.s32 %s259, 1
      %p263 = scmp.eq.s32.totalorder %s33, 1
      %p264 = scmp.ne.s32.totalorder %s259, %s261
      %p265 = scmp.eq.s32.totalorder %s33, 0
      %p266 = por %p264, %p265
      %p267 = scmp.ne.s32.totalorder %s259, %s261
      %p268 = scmp.eq.s32.totalorder %s38, 1
      %p269 = por %p267, %p268
      %p270 = scmp.ne.s32.totalorder %s261, %s262
      %p271 = scmp.eq.s32.totalorder %s38, 0
      %p272 = por %p270, %p271
      %p273 = scmp.ne.s32.totalorder %s261, %s262
      %p274 = scmp.eq.s32.totalorder %s39, 1
      %p275 = por %p273, %p274
      %p277 = scmp.ne.s32.totalorder %s262, %s276
      %p278 = scmp.eq.s32.totalorder %s39, 0
      %p279 = por %p277, %p278
      %s281 = sadd.s32 %s280, 1
      %p284 = scmp.eq.s32.totalorder %s33, 1
      %p285 = scmp.ne.s32.totalorder %s280, %s282
      %p286 = scmp.eq.s32.totalorder %s33, 0
      %p287 = por %p285, %p286
      %p288 = scmp.ne.s32.totalorder %s280, %s282
      %p289 = scmp.eq.s32.totalorder %s38, 1
      %p290 = por %p288, %p289
      %p291 = scmp.ne.s32.totalorder %s282, %s283
      %p292 = scmp.eq.s32.totalorder %s38, 0
      %p293 = por %p291, %p292
      %p294 = scmp.ne.s32.totalorder %s282, %s283
      %p295 = scmp.eq.s32.totalorder %s39, 1
      %p296 = por %p294, %p295
      %p298 = scmp.ne.s32.totalorder %s283, %s297
      %p299 = scmp.eq.s32.totalorder %s39, 0
      %p300 = por %p298, %p299
      %s301 = ssub.s32 %s40, %s52
      %s302 = ssub.s32 %s41, %s48
      %s303 = sor.u32 %s301, %s302
      %p304 = scmp.eq.s32.totalorder %s303, 0
      %s306 = sadd.s32 %s305, 1
      %s307 = scalar_select %p304, %s305, %s306
      %p310 = pneg %p304
      %p311 = scmp.eq.s32.totalorder %s33, 1
      %p312 = por %p310, %p311
      %p313 = scmp.ne.s32.totalorder %s305, %s308
      %p314 = scmp.eq.s32.totalorder %s33, 0
      %p315 = por %p313, %p314
      %p316 = scmp.ne.s32.totalorder %s305, %s308
      %p317 = scmp.eq.s32.totalorder %s38, 1
      %p318 = por %p316, %p317
      %p319 = scmp.ne.s32.totalorder %s308, %s309
      %p320 = scmp.eq.s32.totalorder %s38, 0
      %p321 = por %p319, %p320
      %p322 = scmp.ne.s32.totalorder %s308, %s309
      %p323 = scmp.eq.s32.totalorder %s39, 1
      %p324 = por %p322, %p323
      %p326 = scmp.ne.s32.totalorder %s309, %s325
      %p327 = scmp.eq.s32.totalorder %s39, 0
      %p328 = por %p326, %p327
      %s329 = ssub.s32 %s40, %s52
      %s330 = ssub.s32 %s41, %s48
      %s331 = sor.u32 %s329, %s330
      %p332 = scmp.eq.s32.totalorder %s331, 0
      %s334 = sadd.s32 %s333, 1
      %s335 = scalar_select %p332, %s333, %s334
      %p338 = pneg %p332
      %p339 = scmp.eq.s32.totalorder %s33, 1
      %p340 = por %p338, %p339
      %p341 = scmp.ne.s32.totalorder %s333, %s336
      %p342 = scmp.eq.s32.totalorder %s33, 0
      %p343 = por %p341, %p342
      %p344 = scmp.ne.s32.totalorder %s333, %s336
      %p345 = scmp.eq.s32.totalorder %s38, 1
      %p346 = por %p344, %p345
      %p347 = scmp.ne.s32.totalorder %s336, %s337
      %p348 = scmp.eq.s32.totalorder %s38, 0
      %p349 = por %p347, %p348
      %p350 = scmp.ne.s32.totalorder %s336, %s337
      %p351 = scmp.eq.s32.totalorder %s39, 1
      %p352 = por %p350, %p351
      %p354 = scmp.ne.s32.totalorder %s337, %s353
      %p355 = scmp.eq.s32.totalorder %s39, 0
      %p356 = por %p354, %p355
      %p357 = scmp.le.s32.totalorder 1, %s33
      %p358 = scmp.lt.s32.totalorder %s33, 3
      %p359 = pnand %p357, %p358
      %p360 = pneg %p359
      // Predicated region
      $region9: #{tpu_custom_call.1} parent=5 // pred_check
        _
      $region10: #{tpu_custom_call.1} parent=5 // pred_check_branch
        %362 = sbr.rel (%p359) target = $region12
      $region11: #{tpu_custom_call.1} parent=5 // pred_region
        %s363 = ssub.s32 %s33, 1
        // Predicated region
        $region13: #{tpu_custom_call.1} parent=11 // pred_check
          %p364 = pneg %p146
        $region14: #{tpu_custom_call.1} parent=11 // pred_check_branch
          %366 = sbr.rel (%p364) target = $region16
        $region15: #{tpu_custom_call.1} parent=11 // pred_region
          %s368 = ssub.s32 256, 256
          %369 = vsyncadd [#allocation10], %s368
          %s370 = sshll.u32 [#allocation9], 4
          %s371 = int_to_ptr.vmem [resolvable:$true] %s370
          %376 = dma.hbm_to_vmem [thread:$0]  %s3, 256, %s371, [#allocation10], 64, 64, 4
        $region16: #{tpu_custom_call.1} parent=11 // pred_fallthru
          _
        // Predicated region
        $region17: #{tpu_custom_call.1} parent=11 // pred_check
          %p377 = pneg %p167
        $region18: #{tpu_custom_call.1} parent=11 // pred_check_branch
          %379 = sbr.rel (%p377) target = $region20
        $region19: #{tpu_custom_call.1} parent=11 // pred_region
          %s381 = ssub.s32 256, 256
          %382 = vsyncadd [#allocation10], %s381
          %s383 = sshll.u32 [#allocation11], 4
          %s384 = int_to_ptr.vmem [resolvable:$true] %s383
          %389 = dma.hbm_to_vmem [thread:$0]  %s4, 256, %s384, [#allocation10], 64, 64, 4
        $region20: #{tpu_custom_call.1} parent=11 // pred_fallthru
          _
        // Predicated region
        $region21: #{tpu_custom_call.1} parent=11 // pred_check
          %p390 = pneg %p188
        $region22: #{tpu_custom_call.1} parent=11 // pred_check_branch
          %392 = sbr.rel (%p390) target = $region24
        $region23: #{tpu_custom_call.1} parent=11 // pred_region
          _
        $region24: #{tpu_custom_call.1} parent=11 // pred_fallthru
          _
        // Predicated region
        $region25: #{tpu_custom_call.1} parent=11 // pred_check
          %p393 = pneg %p209
        $region26: #{tpu_custom_call.1} parent=11 // pred_check_branch
          %395 = sbr.rel (%p393) target = $region28
        $region27: #{tpu_custom_call.1} parent=11 // pred_region
          _
        $region28: #{tpu_custom_call.1} parent=11 // pred_fallthru
          _
        // Predicated region
        $region29: #{tpu_custom_call.1} parent=11 // pred_check
          %p396 = pneg %p230
        $region30: #{tpu_custom_call.1} parent=11 // pred_check_branch
          %398 = sbr.rel (%p396) target = $region32
        $region31: #{tpu_custom_call.1} parent=11 // pred_region
          _
        $region32: #{tpu_custom_call.1} parent=11 // pred_fallthru
          _
        // Predicated region
        $region33: #{tpu_custom_call.1} parent=11 // pred_check
          %p399 = pneg %p251
        $region34: #{tpu_custom_call.1} parent=11 // pred_check_branch
          %401 = sbr.rel (%p399) target = $region36
        $region35: #{tpu_custom_call.1} parent=11 // pred_region
          %s403 = ssub.s32 16, 16
          %404 = vsyncadd [#allocation13], %s403
          %s406 = sshll.u32 [#allocation12], 4
          %s407 = int_to_ptr.vmem [resolvable:$true] %s406
          %409 = dma.hbm_to_vmem [thread:$0]  %s8, 16, %s407, [#allocation13]
        $region36: #{tpu_custom_call.1} parent=11 // pred_fallthru
          _
        // Predicated region
        $region37: #{tpu_custom_call.1} parent=11 // pred_check
          %p410 = pneg %p272
        $region38: #{tpu_custom_call.1} parent=11 // pred_check_branch
          %412 = sbr.rel (%p410) target = $region40
        $region39: #{tpu_custom_call.1} parent=11 // pred_region
          _
        $region40: #{tpu_custom_call.1} parent=11 // pred_fallthru
          _
        // Predicated region
        $region41: #{tpu_custom_call.1} parent=11 // pred_check
          %p413 = pneg %p293
        $region42: #{tpu_custom_call.1} parent=11 // pred_check_branch
          %415 = sbr.rel (%p413) target = $region44
        $region43: #{tpu_custom_call.1} parent=11 // pred_region
          _
        $region44: #{tpu_custom_call.1} parent=11 // pred_fallthru
          _
      $region12: #{tpu_custom_call.1} parent=5 // pred_fallthru
        _
      %p416 = scmp.lt.s32.totalorder %s33, 2
      // Predicated region
      $region45: #{tpu_custom_call.1} parent=5 // pred_check
        %p417 = pneg %p416
      $region46: #{tpu_custom_call.1} parent=5 // pred_check_branch
        %419 = sbr.rel (%p417) target = $region48
      $region47: #{tpu_custom_call.1} parent=5 // pred_region
        // Predicated region
        $region49: #{tpu_custom_call.1} parent=47 // pred_check
          %p420 = pneg %p67
        $region50: #{tpu_custom_call.1} parent=47 // pred_check_branch
          %422 = sbr.rel (%p420) target = $region52
        $region51: #{tpu_custom_call.1} parent=47 // pred_region
          %s423 = sand.u32 %s57, 1
          %s424 = scalar_lea.sflag [#allocation4], %s423
          %s425 = sand.u32 %s57, 1
          %s426 = smul.addr %s425, 4
          %s427 = scalar_lea.vmem [#allocation3], %s426
          %s429 = ssub.s32 64, 64
          %430 = vsyncadd %s424, %s429
          %s431 = sadd.s32 %s41, %s40
          %s432 = smul.addr %s431, 64
          %s433 = scalar_lea.hbm %s0, %s432
          %s435 = sshll.u32 %s427, 4
          %s436 = int_to_ptr.vmem [resolvable:$true] %s435
          %438 = dma.hbm_to_vmem [thread:$0]  %s433, 64, %s436, %s424
        $region52: #{tpu_custom_call.1} parent=47 // pred_fallthru
          _
        // Predicated region
        $region53: #{tpu_custom_call.1} parent=47 // pred_check
          %p439 = pneg %p93
        $region54: #{tpu_custom_call.1} parent=47 // pred_check_branch
          %441 = sbr.rel (%p439) target = $region56
        $region55: #{tpu_custom_call.1} parent=47 // pred_region
          %s442 = sand.u32 %s33, 1
          %s443 = scalar_lea.sflag [#allocation7], %s442
          %s444 = sand.u32 %s83, 1
          %s445 = smul.addr %s444, 4
          %s446 = scalar_lea.vmem [#allocation6], %s445
          %s448 = ssub.s32 64, 64
          %449 = vsyncadd %s443, %s448
          %s450 = smul.addr %s40, 64
          %s451 = scalar_lea.hbm %s1, %s450
          %s453 = sshll.u32 %s446, 4
          %s454 = int_to_ptr.vmem [resolvable:$true] %s453
          %456 = dma.hbm_to_vmem [thread:$0]  %s451, 64, %s454, %s443
        $region56: #{tpu_custom_call.1} parent=47 // pred_fallthru
          _
        // Predicated region
        $region57: #{tpu_custom_call.1} parent=47 // pred_check
          %p457 = pneg %p119
        $region58: #{tpu_custom_call.1} parent=47 // pred_check_branch
          %459 = sbr.rel (%p457) target = $region60
        $region59: #{tpu_custom_call.1} parent=47 // pred_region
          %s460 = sand.u32 %s33, 1
          %s461 = scalar_lea.sflag [#allocation7], %s460
          %s462 = sand.u32 %s109, 1
          %s463 = smul.addr %s462, 4
          %s464 = scalar_lea.vmem [#allocation8], %s463
          %s466 = ssub.s32 64, 64
          %467 = vsyncadd %s461, %s466
          %s468 = smul.addr %s40, 64
          %s469 = scalar_lea.hbm %s2, %s468
          %s471 = sshll.u32 %s464, 4
          %s472 = int_to_ptr.vmem [resolvable:$true] %s471
          %474 = dma.hbm_to_vmem [thread:$0]  %s469, 64, %s472, %s461
        $region60: #{tpu_custom_call.1} parent=47 // pred_fallthru
          _
      $region48: #{tpu_custom_call.1} parent=5 // pred_fallthru
        _
      %p475 = scmp.le.s32.totalorder 1, %s33
      %p476 = scmp.lt.s32.totalorder %s33, 3
      %p477 = pnand %p475, %p476
      %p478 = pneg %p477
      // Predicated region
      $region61: #{tpu_custom_call.1} parent=5 // pred_check
        _
      $region62: #{tpu_custom_call.1} parent=5 // pred_check_branch
        %480 = sbr.rel (%p477) target = $region64
      $region63: #{tpu_custom_call.1} parent=5 // pred_region
        %s481 = ssub.s32 %s33, 1
        %s482 = sand.u32 %s60, 1
        %s483 = scalar_lea.sflag [#allocation4], %s482
        %s484 = sand.u32 %s60, 1
        %s485 = smul.addr %s484, 4
        %s486 = scalar_lea.vmem [#allocation3], %s485
        // Predicated region
        $region65: #{tpu_custom_call.1} parent=63 // pred_check
          %p487 = pneg %p73
        $region66: #{tpu_custom_call.1} parent=63 // pred_check_branch
          %489 = sbr.rel (%p487) target = $region68
        $region67: #{tpu_custom_call.1} parent=63 // pred_region
          %490 = dma.done %s483, 64
        $region68: #{tpu_custom_call.1} parent=63 // pred_fallthru
          _
        %s491 = sand.u32 %s38, 1
        %s492 = scalar_lea.sflag [#allocation7], %s491
        %s493 = sand.u32 %s86, 1
        %s494 = smul.addr %s493, 4
        %s495 = scalar_lea.vmem [#allocation6], %s494
        // Predicated region
        $region69: #{tpu_custom_call.1} parent=63 // pred_check
          %p496 = pneg %p99
        $region70: #{tpu_custom_call.1} parent=63 // pred_check_branch
          %498 = sbr.rel (%p496) target = $region72
        $region71: #{tpu_custom_call.1} parent=63 // pred_region
          %499 = dma.done %s492, 64
        $region72: #{tpu_custom_call.1} parent=63 // pred_fallthru
          _
        %s500 = sand.u32 %s38, 1
        %s501 = scalar_lea.sflag [#allocation7], %s500
        %s502 = sand.u32 %s112, 1
        %s503 = smul.addr %s502, 4
        %s504 = scalar_lea.vmem [#allocation8], %s503
        // Predicated region
        $region73: #{tpu_custom_call.1} parent=63 // pred_check
          %p505 = pneg %p125
        $region74: #{tpu_custom_call.1} parent=63 // pred_check_branch
          %507 = sbr.rel (%p505) target = $region76
        $region75: #{tpu_custom_call.1} parent=63 // pred_region
          %508 = dma.done %s501, 64
        $region76: #{tpu_custom_call.1} parent=63 // pred_fallthru
          _
        // Predicated region
        $region77: #{tpu_custom_call.1} parent=63 // pred_check
          %p509 = pneg %p146
        $region78: #{tpu_custom_call.1} parent=63 // pred_check_branch
          %511 = sbr.rel (%p509) target = $region80
        $region79: #{tpu_custom_call.1} parent=63 // pred_region
          %512 = dma.done [#allocation10], 256
        $region80: #{tpu_custom_call.1} parent=63 // pred_fallthru
          _
        // Predicated region
        $region81: #{tpu_custom_call.1} parent=63 // pred_check
          %p513 = pneg %p167
        $region82: #{tpu_custom_call.1} parent=63 // pred_check_branch
          %515 = sbr.rel (%p513) target = $region84
        $region83: #{tpu_custom_call.1} parent=63 // pred_region
          %516 = dma.done [#allocation10], 256
        $region84: #{tpu_custom_call.1} parent=63 // pred_fallthru
          _
        // Predicated region
        $region85: #{tpu_custom_call.1} parent=63 // pred_check
          %p517 = pneg %p251
        $region86: #{tpu_custom_call.1} parent=63 // pred_check_branch
          %519 = sbr.rel (%p517) target = $region88
        $region87: #{tpu_custom_call.1} parent=63 // pred_region
          %520 = dma.done [#allocation13], 16
        $region88: #{tpu_custom_call.1} parent=63 // pred_fallthru
          _
        %s521 = sand.u32 %s60, 1
        %s522 = scalar_lea.sflag [#allocation4], %s521
        %s523 = sand.u32 %s60, 1
        %s524 = smul.addr %s523, 4
        %s525 = scalar_lea.vmem [#allocation3], %s524
        %p526 = pneg %p73
        %p527 = pneg %p70
        %s528 = sand.u32 %s38, 1
        %s529 = scalar_lea.sflag [#allocation7], %s528
        %s530 = sand.u32 %s86, 1
        %s531 = smul.addr %s530, 4
        %s532 = scalar_lea.vmem [#allocation6], %s531
        %p533 = pneg %p99
        %p534 = pneg %p96
        %s535 = sand.u32 %s38, 1
        %s536 = scalar_lea.sflag [#allocation7], %s535
        %s537 = sand.u32 %s112, 1
        %s538 = smul.addr %s537, 4
        %s539 = scalar_lea.vmem [#allocation8], %s538
        %p540 = pneg %p125
        %p541 = pneg %p122
        %p542 = pneg %p146
        %p543 = pneg %p143
        %p544 = pneg %p167
        %p545 = pneg %p164
        %p546 = pneg %p188
        %p547 = pneg %p185
        %p548 = pneg %p209
        %p549 = pneg %p206
        %p550 = pneg %p230
        %p551 = pneg %p227
        %p552 = pneg %p251
        %p553 = pneg %p248
        %p554 = pneg %p272
        %p555 = pneg %p269
        %p556 = pneg %p293
        %p557 = pneg %p290
        %p558 = pneg %p321
        %p559 = pneg %p318
        %s560 = sand.u32 %s308, 1
        %s561 = scalar_lea.sflag [#allocation5], %s560
        %s562 = sand.u32 %s308, 1
        %s563 = smul.addr %s562, 8
        %s564 = scalar_lea.vmem [#allocation14], %s563
        %p565 = pneg %p349
        %p566 = pneg %p346
        %s567 = sand.u32 %s336, 1
        %s568 = scalar_lea.sflag [#allocation16], %s567
        %s569 = sand.u32 %s336, 1
        %s570 = smul.addr %s569, 8
        %s571 = scalar_lea.vmem [#allocation15], %s570
        %v573 = vld [vmem:[%s486] sm:$0xf]
        %v574 = vld [vmem:[%s495] sm:$0xf]
        %v575 = vld [vmem:[%s504] sm:$0xf]
        %v576 = vld [vmem:[#allocation9] sm:$0xf]
        %v577 = vld [vmem:[#allocation9 + $0x4] sm:$0xf]
        %v578 = vld [vmem:[#allocation9 + $0x8] sm:$0xf]
        %v579 = vld [vmem:[#allocation9 + $0xc] sm:$0xf]
        %v580 = vld [vmem:[%s6] sm:$0x1]
        %v582 = vlaneseq
        %v583 = vshrl.u32 %v582, 7
        %v584 = vsub.s32 0, %v583
        %v585 = vrot.slane %v580, %v584
        %v591 = vunpack.c.l.b16 %v576
        %v592 = vunpack.c.l.b16 %v577
        %v593 = vunpack.c.l.b16 %v578
        %v594 = vunpack.c.l.b16 %v579
        %v595 = vpack.c.b16 %v592, %v591
        %v596 = vpack.c.b16 %v594, %v593
        %vm599 = vcmask 261120
        %v601 = vsel %vm599, %v573, 0
        %603 = vmatprep.subr.bf16.mxu0 0
        %604 = vmatpush1.bf16.msra.mxu0 %v595
        %605 = vmatprep.subr.bf16.mxu0 0
        %606 = vmatpush1.bf16.msra.mxu0 %v596
        %607 = vmatprep.subr.bf16.mxu0 0
        %608 = vmatpush1.bf16.msra.mxu0 0
        %609 = vmatprep.subr.bf16.mxu0 0
        %610 = vmatpush1.bf16.msra.mxu0 0
        %611 = vmatprep.subr.bf16.mxu0 0
        %612 = vmatpush1.bf16.msra.mxu0 0
        %613 = vmatprep.subr.bf16.mxu0 0
        %614 = vmatpush1.bf16.msra.mxu0 0
        %615 = vmatprep.subr.bf16.mxu0 0
        %616 = vmatpush1.bf16.msra.mxu0 0
        %617 = vmatprep.subr.bf16.mxu0 0
        %618 = vmatpush1.bf16.msra.mxu0 0
        %619 = vmatprep.subr.bf16.mxu0 0
        %620 = vmatpush1.bf16.msra.mxu0 0
        %621 = vmatprep.subr.bf16.mxu0 0
        %622 = vmatpush1.bf16.msra.mxu0 0
        %623 = vmatprep.subr.bf16.mxu0 0
        %624 = vmatpush1.bf16.msra.mxu0 0
        %625 = vmatprep.subr.bf16.mxu0 0
        %626 = vmatpush1.bf16.msra.mxu0 0
        %627 = vmatprep.subr.bf16.mxu0 0
        %628 = vmatpush1.bf16.msra.mxu0 0
        %629 = vmatprep.subr.bf16.mxu0 0
        %630 = vmatpush1.bf16.msra.mxu0 0
        %631 = vmatprep.subr.bf16.mxu0 0
        %632 = vmatpush1.bf16.msra.mxu0 0
        %633 = vmatprep.subr.bf16.mxu0 0
        %634 = vmatpush1.bf16.msra.mxu0 0
        %635 = vmatprep.mubr.bf16.mxu0 0
        %636 = vmatmul.mubr.bf16.gmra.mrb[0].mxu0 %v601
        %v637 = vpop.f32.mrb[0].mxu0
        %v638 = vadd.f32 %v585, %v637
        %v639 = vpop.f32.mrb[0].mxu0
        %v640 = vpop.f32.mrb[0].mxu0
        %v641 = vpop.f32.mrb[0].mxu0
        %642 = vdwg.mxu0
        %v643 = vmul.f32 %v638, 0.35355338
        %v644 = vld [vmem:[#allocation11] sm:$0xf]
        %v645 = vld [vmem:[#allocation11 + $0x4] sm:$0xf]
        %v646 = vld [vmem:[#allocation11 + $0x8] sm:$0xf]
        %v647 = vld [vmem:[#allocation11 + $0xc] sm:$0xf]
        %v648 = vld [vmem:[%s7] sm:$0x1]
        %v650 = vlaneseq
        %v651 = vshrl.u32 %v650, 7
        %v652 = vsub.s32 0, %v651
        %v653 = vrot.slane %v648, %v652
        %v659 = vunpack.c.l.b16 %v644
        %v660 = vunpack.c.l.b16 %v645
        %v661 = vunpack.c.l.b16 %v646
        %v662 = vunpack.c.l.b16 %v647
        %v663 = vpack.c.b16 %v660, %v659
        %v664 = vpack.c.b16 %v662, %v661
        %v668 = vsel %vm599, %v574, 0
        %670 = vmatprep.subr.bf16.mxu0 0
        %671 = vmatpush1.bf16.msra.mxu0 %v663
        %672 = vmatprep.subr.bf16.mxu0 0
        %673 = vmatpush1.bf16.msra.mxu0 %v664
        %674 = vmatprep.subr.bf16.mxu0 0
        %675 = vmatpush1.bf16.msra.mxu0 0
        %676 = vmatprep.subr.bf16.mxu0 0
        %677 = vmatpush1.bf16.msra.mxu0 0
        %678 = vmatprep.subr.bf16.mxu0 0
        %679 = vmatpush1.bf16.msra.mxu0 0
        %680 = vmatprep.subr.bf16.mxu0 0
        %681 = vmatpush1.bf16.msra.mxu0 0
        %682 = vmatprep.subr.bf16.mxu0 0
        %683 = vmatpush1.bf16.msra.mxu0 0
        %684 = vmatprep.subr.bf16.mxu0 0
        %685 = vmatpush1.bf16.msra.mxu0 0
        %686 = vmatprep.subr.bf16.mxu0 0
        %687 = vmatpush1.bf16.msra.mxu0 0
        %688 = vmatprep.subr.bf16.mxu0 0
        %689 = vmatpush1.bf16.msra.mxu0 0
        %690 = vmatprep.subr.bf16.mxu0 0
        %691 = vmatpush1.bf16.msra.mxu0 0
        %692 = vmatprep.subr.bf16.mxu0 0
        %693 = vmatpush1.bf16.msra.mxu0 0
        %694 = vmatprep.subr.bf16.mxu0 0
        %695 = vmatpush1.bf16.msra.mxu0 0
        %696 = vmatprep.subr.bf16.mxu0 0
        %697 = vmatpush1.bf16.msra.mxu0 0
        %698 = vmatprep.subr.bf16.mxu0 0
        %699 = vmatpush1.bf16.msra.mxu0 0
        %700 = vmatprep.subr.bf16.mxu0 0
        %701 = vmatpush1.bf16.msra.mxu0 0
        %702 = vmatprep.mubr.bf16.mxu0 0
        %703 = vmatmul.mubr.bf16.gmra.mrb[0].mxu0 %v668
        %v704 = vpop.f32.mrb[0].mxu0
        %v705 = vadd.f32 %v653, %v704
        %v706 = vpop.f32.mrb[0].mxu0
        %v707 = vpop.f32.mrb[0].mxu0
        %v708 = vpop.f32.mrb[0].mxu0
        %709 = vdwg.mxu0
        %v710 = vld [vmem:[%s5] sm:$0xf]
        %v711 = vld [vmem:[%s5 + $0x4] sm:$0xf]
        %v712 = vld [vmem:[%s5 + $0x8] sm:$0xf]
        %v713 = vld [vmem:[%s5 + $0xc] sm:$0xf]
        %v714 = vld [vmem:[#allocation12] sm:$0x1]
        %v716 = vlaneseq
        %v717 = vshrl.u32 %v716, 7
        %v718 = vsub.s32 0, %v717
        %v719 = vrot.slane %v714, %v718
        %v725 = vunpack.c.l.b16 %v710
        %v726 = vunpack.c.l.b16 %v711
        %v727 = vunpack.c.l.b16 %v712
        %v728 = vunpack.c.l.b16 %v713
        %v729 = vpack.c.b16 %v726, %v725
        %v730 = vpack.c.b16 %v728, %v727
        %v734 = vsel %vm599, %v575, 0
        %736 = vmatprep.subr.bf16.mxu0 0
        %737 = vmatpush1.bf16.msra.mxu0 %v729
        %738 = vmatprep.subr.bf16.mxu0 0
        %739 = vmatpush1.bf16.msra.mxu0 %v730
        %740 = vmatprep.subr.bf16.mxu0 0
        %741 = vmatpush1.bf16.msra.mxu0 0
        %742 = vmatprep.subr.bf16.mxu0 0
        %743 = vmatpush1.bf16.msra.mxu0 0
        %744 = vmatprep.subr.bf16.mxu0 0
        %745 = vmatpush1.bf16.msra.mxu0 0
        %746 = vmatprep.subr.bf16.mxu0 0
        %747 = vmatpush1.bf16.msra.mxu0 0
        %748 = vmatprep.subr.bf16.mxu0 0
        %749 = vmatpush1.bf16.msra.mxu0 0
        %750 = vmatprep.subr.bf16.mxu0 0
        %751 = vmatpush1.bf16.msra.mxu0 0
        %752 = vmatprep.subr.bf16.mxu0 0
        %753 = vmatpush1.bf16.msra.mxu0 0
        %754 = vmatprep.subr.bf16.mxu0 0
        %755 = vmatpush1.bf16.msra.mxu0 0
        %756 = vmatprep.subr.bf16.mxu0 0
        %757 = vmatpush1.bf16.msra.mxu0 0
        %758 = vmatprep.subr.bf16.mxu0 0
        %759 = vmatpush1.bf16.msra.mxu0 0
        %760 = vmatprep.subr.bf16.mxu0 0
        %761 = vmatpush1.bf16.msra.mxu0 0
        %762 = vmatprep.subr.bf16.mxu0 0
        %763 = vmatpush1.bf16.msra.mxu0 0
        %764 = vmatprep.subr.bf16.mxu0 0
        %765 = vmatpush1.bf16.msra.mxu0 0
        %766 = vmatprep.subr.bf16.mxu0 0
        %767 = vmatpush1.bf16.msra.mxu0 0
        %768 = vmatprep.mubr.bf16.mxu0 0
        %769 = vmatmul.mubr.bf16.gmra.mrb[0].mxu0 %v734
        %v770 = vpop.f32.mrb[0].mxu0
        %v771 = vadd.f32 %v719, %v770
        %v772 = vpop.f32.mrb[0].mxu0
        %v773 = vpop.f32.mrb[0].mxu0
        %v774 = vpop.f32.mrb[0].mxu0
        %775 = vdwg.mxu0
        %v776 = vpack.c.bf16 %v643, %v643
        %v777 = vpack.c.bf16 %v705, %v705
        %v778 = vpack.c.bf16 %v771, %v771
        %vm779 = vcmask 64512
        %v781 = vsel %vm779, %v776, 0
        %v784 = vsel %vm779, %v777, 0
        %786 = vmatprep.subr.bf16.mxu0 0
        %787 = vmatpush1.bf16.xpose.msra.mxu0 %v784
        %788 = vmatprep.subr.bf16.mxu0 0
        %789 = vmatpush1.bf16.xpose.msra.mxu0 0
        %790 = vmatprep.subr.bf16.mxu0 0
        %791 = vmatpush1.bf16.xpose.msra.mxu0 0
        %792 = vmatprep.subr.bf16.mxu0 0
        %793 = vmatpush1.bf16.xpose.msra.mxu0 0
        %794 = vmatprep.subr.bf16.mxu0 0
        %795 = vmatpush1.bf16.xpose.msra.mxu0 0
        %796 = vmatprep.subr.bf16.mxu0 0
        %797 = vmatpush1.bf16.xpose.msra.mxu0 0
        %798 = vmatprep.subr.bf16.mxu0 0
        %799 = vmatpush1.bf16.xpose.msra.mxu0 0
        %800 = vmatprep.subr.bf16.mxu0 0
        %801 = vmatpush1.bf16.xpose.msra.mxu0 0
        %802 = vmatprep.subr.bf16.mxu0 0
        %803 = vmatpush1.bf16.xpose.msra.mxu0 0
        %804 = vmatprep.subr.bf16.mxu0 0
        %805 = vmatpush1.bf16.xpose.msra.mxu0 0
        %806 = vmatprep.subr.bf16.mxu0 0
        %807 = vmatpush1.bf16.xpose.msra.mxu0 0
        %808 = vmatprep.subr.bf16.mxu0 0
        %809 = vmatpush1.bf16.xpose.msra.mxu0 0
        %810 = vmatprep.subr.bf16.mxu0 0
        %811 = vmatpush1.bf16.xpose.msra.mxu0 0
        %812 = vmatprep.subr.bf16.mxu0 0
        %813 = vmatpush1.bf16.xpose.msra.mxu0 0
        %814 = vmatprep.subr.bf16.mxu0 0
        %815 = vmatpush1.bf16.xpose.msra.mxu0 0
        %816 = vmatprep.subr.bf16.mxu0 0
        %817 = vmatpush1.bf16.xpose.msra.mxu0 0
        %818 = vmatprep.mubr.bf16.mxu0 0
        %819 = vmatmul.mubr.bf16.gmra.mrb[0].mxu0 %v781
        %v820 = vpop.f32.mrb[0].mxu0
        %v821 = vadd.f32 0.0, %v820
        %v822 = vpop.f32.mrb[0].mxu0
        %v823 = vpop.f32.mrb[0].mxu0
        %v824 = vpop.f32.mrb[0].mxu0
        %825 = vdwg.mxu0
        %v826 = vsel %vm779, %v821, -inf
        %827 = vmax.xlane.f32.xlu0 %v826
        %v828 = vpop.xlane.xlu0 %827
        %v829 = vsub.f32 %v821, %v828
        %v830 = vmul.f32 %v829, 1.442695
        %v831 = vpow.pop %v830
        %v832 = vsel %vm779, %v831, 0.0
        %833 = vadd.xlane.f32.xlu0 %v832
        %v834 = vpop.xlane.xlu0 %833
        %v835 = vrcp.pop %v834
        %v836 = vmul.f32 %v831, %v835
        %v837 = vpack.c.bf16 %v836, %v836
        %v839 = vsel %vm779, %v837, 0
        %vm841 = vcmask 1043456
        %v843 = vsel %vm841, %v778, 0
        %845 = vmatprep.subr.bf16.mxu0 0
        %846 = vmatpush1.bf16.msra.mxu0 %v843
        %847 = vmatprep.subr.bf16.mxu0 0
        %848 = vmatpush1.bf16.msra.mxu0 0
        %849 = vmatprep.subr.bf16.mxu0 0
        %850 = vmatpush1.bf16.msra.mxu0 0
        %851 = vmatprep.subr.bf16.mxu0 0
        %852 = vmatpush1.bf16.msra.mxu0 0
        %853 = vmatprep.subr.bf16.mxu0 0
        %854 = vmatpush1.bf16.msra.mxu0 0
        %855 = vmatprep.subr.bf16.mxu0 0
        %856 = vmatpush1.bf16.msra.mxu0 0
        %857 = vmatprep.subr.bf16.mxu0 0
        %858 = vmatpush1.bf16.msra.mxu0 0
        %859 = vmatprep.subr.bf16.mxu0 0
        %860 = vmatpush1.bf16.msra.mxu0 0
        %861 = vmatprep.subr.bf16.mxu0 0
        %862 = vmatpush1.bf16.msra.mxu0 0
        %863 = vmatprep.subr.bf16.mxu0 0
        %864 = vmatpush1.bf16.msra.mxu0 0
        %865 = vmatprep.subr.bf16.mxu0 0
        %866 = vmatpush1.bf16.msra.mxu0 0
        %867 = vmatprep.subr.bf16.mxu0 0
        %868 = vmatpush1.bf16.msra.mxu0 0
        %869 = vmatprep.subr.bf16.mxu0 0
        %870 = vmatpush1.bf16.msra.mxu0 0
        %871 = vmatprep.subr.bf16.mxu0 0
        %872 = vmatpush1.bf16.msra.mxu0 0
        %873 = vmatprep.subr.bf16.mxu0 0
        %874 = vmatpush1.bf16.msra.mxu0 0
        %875 = vmatprep.subr.bf16.mxu0 0
        %876 = vmatpush1.bf16.msra.mxu0 0
        %877 = vmatprep.mubr.bf16.mxu0 0
        %878 = vmatmul.mubr.bf16.gmra.mrb[0].mxu0 %v839
        %v879 = vpop.f32.mrb[0].mxu0
        %v880 = vadd.f32 0.0, %v879
        %v881 = vpop.f32.mrb[0].mxu0
        %v882 = vpop.f32.mrb[0].mxu0
        %v883 = vpop.f32.mrb[0].mxu0
        %884 = vdwg.mxu0
        %v885 = vpack.c.bf16 %v880, %v880
        %vm886 = vcmask 60416
        %887 = vst.msk [vmem:[#allocation2] sm:$0xf] %vm886, %v885
        %889 = vrot.lane.b32.xlu0 %v776, 120
        %v890 = vpop.permute.xlu0 %889
        %892 = vrot.lane.b32.xlu0 %v777, 120
        %v893 = vpop.permute.xlu0 %892
        %v895 = vsel %vm779, %v890, 0
        %v898 = vsel %vm779, %v893, 0
        %900 = vmatprep.subr.bf16.mxu0 0
        %901 = vmatpush1.bf16.xpose.msra.mxu0 %v898
        %902 = vmatprep.subr.bf16.mxu0 0
        %903 = vmatpush1.bf16.xpose.msra.mxu0 0
        %904 = vmatprep.subr.bf16.mxu0 0
        %905 = vmatpush1.bf16.xpose.msra.mxu0 0
        %906 = vmatprep.subr.bf16.mxu0 0
        %907 = vmatpush1.bf16.xpose.msra.mxu0 0
        %908 = vmatprep.subr.bf16.mxu0 0
        %909 = vmatpush1.bf16.xpose.msra.mxu0 0
        %910 = vmatprep.subr.bf16.mxu0 0
        %911 = vmatpush1.bf16.xpose.msra.mxu0 0
        %912 = vmatprep.subr.bf16.mxu0 0
        %913 = vmatpush1.bf16.xpose.msra.mxu0 0
        %914 = vmatprep.subr.bf16.mxu0 0
        %915 = vmatpush1.bf16.xpose.msra.mxu0 0
        %916 = vmatprep.subr.bf16.mxu0 0
        %917 = vmatpush1.bf16.xpose.msra.mxu0 0
        %918 = vmatprep.subr.bf16.mxu0 0
        %919 = vmatpush1.bf16.xpose.msra.mxu0 0
        %920 = vmatprep.subr.bf16.mxu0 0
        %921 = vmatpush1.bf16.xpose.msra.mxu0 0
        %922 = vmatprep.subr.bf16.mxu0 0
        %923 = vmatpush1.bf16.xpose.msra.mxu0 0
        %924 = vmatprep.subr.bf16.mxu0 0
        %925 = vmatpush1.bf16.xpose.msra.mxu0 0
        %926 = vmatprep.subr.bf16.mxu0 0
        %927 = vmatpush1.bf16.xpose.msra.mxu0 0
        %928 = vmatprep.subr.bf16.mxu0 0
        %929 = vmatpush1.bf16.xpose.msra.mxu0 0
        %930 = vmatprep.subr.bf16.mxu0 0
        %931 = vmatpush1.bf16.xpose.msra.mxu0 0
        %932 = vmatprep.mubr.bf16.mxu0 0
        %933 = vmatmul.mubr.bf16.gmra.mrb[0].mxu0 %v895
        %v934 = vpop.f32.mrb[0].mxu0
        %v935 = vadd.f32 0.0, %v934
        %v936 = vpop.f32.mrb[0].mxu0
        %v937 = vpop.f32.mrb[0].mxu0
        %v938 = vpop.f32.mrb[0].mxu0
        %939 = vdwg.mxu0
        %v940 = vsel %vm779, %v935, -inf
        %941 = vmax.xlane.f32.xlu0 %v940
        %v942 = vpop.xlane.xlu0 %941
        %v943 = vsub.f32 %v935, %v942
        %v944 = vmul.f32 %v943, 1.442695
        %v945 = vpow.pop %v944
        %v946 = vsel %vm779, %v945, 0.0
        %947 = vadd.xlane.f32.xlu0 %v946
        %v948 = vpop.xlane.xlu0 %947
        %v949 = vrcp.pop %v948
        %v950 = vmul.f32 %v945, %v949
        %v951 = vpack.c.bf16 %v950, %v950
        %953 = vrot.lane.b32.xlu0 %v778, 120
        %v954 = vpop.permute.xlu0 %953
        %v956 = vsel %vm779, %v951, 0
        %v959 = vsel %vm841, %v954, 0
        %961 = vmatprep.subr.bf16.mxu0 0
        %962 = vmatpush1.bf16.msra.mxu0 %v959
        %963 = vmatprep.subr.bf16.mxu0 0
        %964 = vmatpush1.bf16.msra.mxu0 0
        %965 = vmatprep.subr.bf16.mxu0 0
        %966 = vmatpush1.bf16.msra.mxu0 0
        %967 = vmatprep.subr.bf16.mxu0 0
        %968 = vmatpush1.bf16.msra.mxu0 0
        %969 = vmatprep.subr.bf16.mxu0 0
        %970 = vmatpush1.bf16.msra.mxu0 0
        %971 = vmatprep.subr.bf16.mxu0 0
        %972 = vmatpush1.bf16.msra.mxu0 0
        %973 = vmatprep.subr.bf16.mxu0 0
        %974 = vmatpush1.bf16.msra.mxu0 0
        %975 = vmatprep.subr.bf16.mxu0 0
        %976 = vmatpush1.bf16.msra.mxu0 0
        %977 = vmatprep.subr.bf16.mxu0 0
        %978 = vmatpush1.bf16.msra.mxu0 0
        %979 = vmatprep.subr.bf16.mxu0 0
        %980 = vmatpush1.bf16.msra.mxu0 0
        %981 = vmatprep.subr.bf16.mxu0 0
        %982 = vmatpush1.bf16.msra.mxu0 0
        %983 = vmatprep.subr.bf16.mxu0 0
        %984 = vmatpush1.bf16.msra.mxu0 0
        %985 = vmatprep.subr.bf16.mxu0 0
        %986 = vmatpush1.bf16.msra.mxu0 0
        %987 = vmatprep.subr.bf16.mxu0 0
        %988 = vmatpush1.bf16.msra.mxu0 0
        %989 = vmatprep.subr.bf16.mxu0 0
        %990 = vmatpush1.bf16.msra.mxu0 0
        %991 = vmatprep.subr.bf16.mxu0 0
        %992 = vmatpush1.bf16.msra.mxu0 0
        %993 = vmatprep.mubr.bf16.mxu0 0
        %994 = vmatmul.mubr.bf16.gmra.mrb[0].mxu0 %v956
        %v995 = vpop.f32.mrb[0].mxu0
        %v996 = vadd.f32 0.0, %v995
        %v997 = vpop.f32.mrb[0].mxu0
        %v998 = vpop.f32.mrb[0].mxu0
        %v999 = vpop.f32.mrb[0].mxu0
        %1000 = vdwg.mxu0
        %v1001 = vpack.c.bf16 %v996, %v996
        %v1003 = vunpack.c.l.b16 %v1001
        %v1004 = vpack.c.b16 %v1003, %v1003
        %1005 = vrot.lane.b32.xlu0 %v1004, 8
        %v1006 = vpop.permute.xlu0 %1005
        %vm1008 = vcmask 126016
        %1009 = vst.msk [vmem:[#allocation2] sm:$0xf] %vm1008, %v1006
        %v1010 = vadd.f32 %v836, %v950
        %1011 = vrot.lane.b32.xlu0 %v776, 112
        %v1012 = vpop.permute.xlu0 %1011
        %1013 = vrot.lane.b32.xlu0 %v777, 112
        %v1014 = vpop.permute.xlu0 %1013
        %v1016 = vsel %vm779, %v1012, 0
        %v1019 = vsel %vm779, %v1014, 0
        %1021 = vmatprep.subr.bf16.mxu0 0
        %1022 = vmatpush1.bf16.xpose.msra.mxu0 %v1019
        %1023 = vmatprep.subr.bf16.mxu0 0
        %1024 = vmatpush1.bf16.xpose.msra.mxu0 0
        %1025 = vmatprep.subr.bf16.mxu0 0
        %1026 = vmatpush1.bf16.xpose.msra.mxu0 0
        %1027 = vmatprep.subr.bf16.mxu0 0
        %1028 = vmatpush1.bf16.xpose.msra.mxu0 0
        %1029 = vmatprep.subr.bf16.mxu0 0
        %1030 = vmatpush1.bf16.xpose.msra.mxu0 0
        %1031 = vmatprep.subr.bf16.mxu0 0
        %1032 = vmatpush1.bf16.xpose.msra.mxu0 0
        %1033 = vmatprep.subr.bf16.mxu0 0
        %1034 = vmatpush1.bf16.xpose.msra.mxu0 0
        %1035 = vmatprep.subr.bf16.mxu0 0
        %1036 = vmatpush1.bf16.xpose.msra.mxu0 0
        %1037 = vmatprep.subr.bf16.mxu0 0
        %1038 = vmatpush1.bf16.xpose.msra.mxu0 0
        %1039 = vmatprep.subr.bf16.mxu0 0
        %1040 = vmatpush1.bf16.xpose.msra.mxu0 0
        %1041 = vmatprep.subr.bf16.mxu0 0
        %1042 = vmatpush1.bf16.xpose.msra.mxu0 0
        %1043 = vmatprep.subr.bf16.mxu0 0
        %1044 = vmatpush1.bf16.xpose.msra.mxu0 0
        %1045 = vmatprep.subr.bf16.mxu0 0
        %1046 = vmatpush1.bf16.xpose.msra.mxu0 0
        %1047 = vmatprep.subr.bf16.mxu0 0
        %1048 = vmatpush1.bf16.xpose.msra.mxu0 0
        %1049 = vmatprep.subr.bf16.mxu0 0
        %1050 = vmatpush1.bf16.xpose.msra.mxu0 0
        %1051 = vmatprep.subr.bf16.mxu0 0
        %1052 = vmatpush1.bf16.xpose.msra.mxu0 0
        %1053 = vmatprep.mubr.bf16.mxu0 0
        %1054 = vmatmul.mubr.bf16.gmra.mrb[0].mxu0 %v1016
        %v1055 = vpop.f32.mrb[0].mxu0
        %v1056 = vadd.f32 0.0, %v1055
        %v1057 = vpop.f32.mrb[0].mxu0
        %v1058 = vpop.f32.mrb[0].mxu0
        %v1059 = vpop.f32.mrb[0].mxu0
        %1060 = vdwg.mxu0
        %v1061 = vsel %vm779, %v1056, -inf
        %1062 = vmax.xlane.f32.xlu0 %v1061
        %v1063 = vpop.xlane.xlu0 %1062
        %v1064 = vsub.f32 %v1056, %v1063
        %v1065 = vmul.f32 %v1064, 1.442695
        %v1066 = vpow.pop %v1065
        %v1067 = vsel %vm779, %v1066, 0.0
        %1068 = vadd.xlane.f32.xlu0 %v1067
        %v1069 = vpop.xlane.xlu0 %1068
        %v1070 = vrcp.pop %v1069
        %v1071 = vmul.f32 %v1066, %v1070
        %v1072 = vpack.c.bf16 %v1071, %v1071
        %1073 = vrot.lane.b32.xlu0 %v778, 112
        %v1074 = vpop.permute.xlu0 %1073
        %v1076 = vsel %vm779, %v1072, 0
        %v1079 = vsel %vm841, %v1074, 0
        %1081 = vmatprep.subr.bf16.mxu0 0
        %1082 = vmatpush1.bf16.msra.mxu0 %v1079
        %1083 = vmatprep.subr.bf16.mxu0 0
        %1084 = vmatpush1.bf16.msra.mxu0 0
        %1085 = vmatprep.subr.bf16.mxu0 0
        %1086 = vmatpush1.bf16.msra.mxu0 0
        %1087 = vmatprep.subr.bf16.mxu0 0
        %1088 = vmatpush1.bf16.msra.mxu0 0
        %1089 = vmatprep.subr.bf16.mxu0 0
        %1090 = vmatpush1.bf16.msra.mxu0 0
        %1091 = vmatprep.subr.bf16.mxu0 0
        %1092 = vmatpush1.bf16.msra.mxu0 0
        %1093 = vmatprep.subr.bf16.mxu0 0
        %1094 = vmatpush1.bf16.msra.mxu0 0
        %1095 = vmatprep.subr.bf16.mxu0 0
        %1096 = vmatpush1.bf16.msra.mxu0 0
        %1097 = vmatprep.subr.bf16.mxu0 0
        %1098 = vmatpush1.bf16.msra.mxu0 0
        %1099 = vmatprep.subr.bf16.mxu0 0
        %1100 = vmatpush1.bf16.msra.mxu0 0
        %1101 = vmatprep.subr.bf16.mxu0 0
        %1102 = vmatpush1.bf16.msra.mxu0 0
        %1103 = vmatprep.subr.bf16.mxu0 0
        %1104 = vmatpush1.bf16.msra.mxu0 0
        %1105 = vmatprep.subr.bf16.mxu0 0
        %1106 = vmatpush1.bf16.msra.mxu0 0
        %1107 = vmatprep.subr.bf16.mxu0 0
        %1108 = vmatpush1.bf16.msra.mxu0 0
        %1109 = vmatprep.subr.bf16.mxu0 0
        %1110 = vmatpush1.bf16.msra.mxu0 0
        %1111 = vmatprep.subr.bf16.mxu0 0
        %1112 = vmatpush1.bf16.msra.mxu0 0
        %1113 = vmatprep.mubr.bf16.mxu0 0
        %1114 = vmatmul.mubr.bf16.gmra.mrb[0].mxu0 %v1076
        %v1115 = vpop.f32.mrb[0].mxu0
        %v1116 = vadd.f32 0.0, %v1115
        %v1117 = vpop.f32.mrb[0].mxu0
        %v1118 = vpop.f32.mrb[0].mxu0
        %v1119 = vpop.f32.mrb[0].mxu0
        %1120 = vdwg.mxu0
        %v1121 = vpack.c.bf16 %v1116, %v1116
        %v1123 = vunpack.c.l.b16 %v1121
        %v1124 = vpack.c.b16 %v1123, %v1123
        %1125 = vrot.lane.b32.xlu0 %v1124, 16
        %v1126 = vpop.permute.xlu0 %1125
        %vm1128 = vcmask 191616
        %1129 = vst.msk [vmem:[#allocation2] sm:$0xf] %vm1128, %v1126
        %v1130 = vadd.f32 %v1010, %v1071
        %1131 = vrot.lane.b32.xlu0 %v776, 104
        %v1132 = vpop.permute.xlu0 %1131
        %1133 = vrot.lane.b32.xlu0 %v777, 104
        %v1134 = vpop.permute.xlu0 %1133
        %v1136 = vsel %vm779, %v1132, 0
        %v1139 = vsel %vm779, %v1134, 0
        %1141 = vmatprep.subr.bf16.mxu0 0
        %1142 = vmatpush1.bf16.xpose.msra.mxu0 %v1139
        %1143 = vmatprep.subr.bf16.mxu0 0
        %1144 = vmatpush1.bf16.xpose.msra.mxu0 0
        %1145 = vmatprep.subr.bf16.mxu0 0
        %1146 = vmatpush1.bf16.xpose.msra.mxu0 0
        %1147 = vmatprep.subr.bf16.mxu0 0
        %1148 = vmatpush1.bf16.xpose.msra.mxu0 0
        %1149 = vmatprep.subr.bf16.mxu0 0
        %1150 = vmatpush1.bf16.xpose.msra.mxu0 0
        %1151 = vmatprep.subr.bf16.mxu0 0
        %1152 = vmatpush1.bf16.xpose.msra.mxu0 0
        %1153 = vmatprep.subr.bf16.mxu0 0
        %1154 = vmatpush1.bf16.xpose.msra.mxu0 0
        %1155 = vmatprep.subr.bf16.mxu0 0
        %1156 = vmatpush1.bf16.xpose.msra.mxu0 0
        %1157 = vmatprep.subr.bf16.mxu0 0
        %1158 = vmatpush1.bf16.xpose.msra.mxu0 0
        %1159 = vmatprep.subr.bf16.mxu0 0
        %1160 = vmatpush1.bf16.xpose.msra.mxu0 0
        %1161 = vmatprep.subr.bf16.mxu0 0
        %1162 = vmatpush1.bf16.xpose.msra.mxu0 0
        %1163 = vmatprep.subr.bf16.mxu0 0
        %1164 = vmatpush1.bf16.xpose.msra.mxu0 0
        %1165 = vmatprep.subr.bf16.mxu0 0
        %1166 = vmatpush1.bf16.xpose.msra.mxu0 0
        %1167 = vmatprep.subr.bf16.mxu0 0
        %1168 = vmatpush1.bf16.xpose.msra.mxu0 0
        %1169 = vmatprep.subr.bf16.mxu0 0
        %1170 = vmatpush1.bf16.xpose.msra.mxu0 0
        %1171 = vmatprep.subr.bf16.mxu0 0
        %1172 = vmatpush1.bf16.xpose.msra.mxu0 0
        %1173 = vmatprep.mubr.bf16.mxu0 0
        %1174 = vmatmul.mubr.bf16.gmra.mrb[0].mxu0 %v1136
        %v1175 = vpop.f32.mrb[0].mxu0
        %v1176 = vadd.f32 0.0, %v1175
        %v1177 = vpop.f32.mrb[0].mxu0
        %v1178 = vpop.f32.mrb[0].mxu0
        %v1179 = vpop.f32.mrb[0].mxu0
        %1180 = vdwg.mxu0
        %v1181 = vsel %vm779, %v1176, -inf
        %1182 = vmax.xlane.f32.xlu0 %v1181
        %v1183 = vpop.xlane.xlu0 %1182
        %v1184 = vsub.f32 %v1176, %v1183
        %v1185 = vmul.f32 %v1184, 1.442695
        %v1186 = vpow.pop %v1185
        %v1187 = vsel %vm779, %v1186, 0.0
        %1188 = vadd.xlane.f32.xlu0 %v1187
        %v1189 = vpop.xlane.xlu0 %1188
        %v1190 = vrcp.pop %v1189
        %v1191 = vmul.f32 %v1186, %v1190
        %v1192 = vpack.c.bf16 %v1191, %v1191
        %1193 = vrot.lane.b32.xlu0 %v778, 104
        %v1194 = vpop.permute.xlu0 %1193
        %v1196 = vsel %vm779, %v1192, 0
        %v1199 = vsel %vm841, %v1194, 0
        %1201 = vmatprep.subr.bf16.mxu0 0
        %1202 = vmatpush1.bf16.msra.mxu0 %v1199
        %1203 = vmatprep.subr.bf16.mxu0 0
        %1204 = vmatpush1.bf16.msra.mxu0 0
        %1205 = vmatprep.subr.bf16.mxu0 0
        %1206 = vmatpush1.bf16.msra.mxu0 0
        %1207 = vmatprep.subr.bf16.mxu0 0
        %1208 = vmatpush1.bf16.msra.mxu0 0
        %1209 = vmatprep.subr.bf16.mxu0 0
        %1210 = vmatpush1.bf16.msra.mxu0 0
        %1211 = vmatprep.subr.bf16.mxu0 0
        %1212 = vmatpush1.bf16.msra.mxu0 0
        %1213 = vmatprep.subr.bf16.mxu0 0
        %1214 = vmatpush1.bf16.msra.mxu0 0
        %1215 = vmatprep.subr.bf16.mxu0 0
        %1216 = vmatpush1.bf16.msra.mxu0 0
        %1217 = vmatprep.subr.bf16.mxu0 0
        %1218 = vmatpush1.bf16.msra.mxu0 0
        %1219 = vmatprep.subr.bf16.mxu0 0
        %1220 = vmatpush1.bf16.msra.mxu0 0
        %1221 = vmatprep.subr.bf16.mxu0 0
        %1222 = vmatpush1.bf16.msra.mxu0 0
        %1223 = vmatprep.subr.bf16.mxu0 0
        %1224 = vmatpush1.bf16.msra.mxu0 0
        %1225 = vmatprep.subr.bf16.mxu0 0
        %1226 = vmatpush1.bf16.msra.mxu0 0
        %1227 = vmatprep.subr.bf16.mxu0 0
        %1228 = vmatpush1.bf16.msra.mxu0 0
        %1229 = vmatprep.subr.bf16.mxu0 0
        %1230 = vmatpush1.bf16.msra.mxu0 0
        %1231 = vmatprep.subr.bf16.mxu0 0
        %1232 = vmatpush1.bf16.msra.mxu0 0
        %1233 = vmatprep.mubr.bf16.mxu0 0
        %1234 = vmatmul.mubr.bf16.gmra.mrb[0].mxu0 %v1196
        %v1235 = vpop.f32.mrb[0].mxu0
        %v1236 = vadd.f32 0.0, %v1235
        %v1237 = vpop.f32.mrb[0].mxu0
        %v1238 = vpop.f32.mrb[0].mxu0
        %v1239 = vpop.f32.mrb[0].mxu0
        %1240 = vdwg.mxu0
        %v1241 = vpack.c.bf16 %v1236, %v1236
        %v1243 = vunpack.c.l.b16 %v1241
        %v1244 = vpack.c.b16 %v1243, %v1243
        %1245 = vrot.lane.b32.xlu0 %v1244, 24
        %v1246 = vpop.permute.xlu0 %1245
        %vm1248 = vcmask 257216
        %1249 = vst.msk [vmem:[#allocation2] sm:$0xf] %vm1248, %v1246
        %v1250 = vadd.f32 %v1130, %v1191
        %v1251 = vld [vmem:[#allocation2] sm:$0xf]
        %v1252 = vld [vmem:[%s9] sm:$0xf]
        %v1253 = vld [vmem:[%s9 + $0x4] sm:$0xf]
        %v1254 = vld [vmem:[%s9 + $0x8] sm:$0xf]
        %v1255 = vld [vmem:[%s9 + $0xc] sm:$0xf]
        %v1256 = vld [vmem:[%s10] sm:$0x1]
        %v1258 = vlaneseq
        %v1259 = vshrl.u32 %v1258, 7
        %v1260 = vsub.s32 0, %v1259
        %v1261 = vrot.slane %v1256, %v1260
        %v1267 = vunpack.c.l.b16 %v1252
        %v1268 = vunpack.c.l.b16 %v1253
        %v1269 = vunpack.c.l.b16 %v1254
        %v1270 = vunpack.c.l.b16 %v1255
        %v1271 = vpack.c.b16 %v1268, %v1267
        %v1272 = vpack.c.b16 %v1270, %v1269
        %v1276 = vsel %vm599, %v1251, 0
        %1278 = vmatprep.subr.bf16.mxu0 0
        %1279 = vmatpush1.bf16.msra.mxu0 %v1271
        %1280 = vmatprep.subr.bf16.mxu0 0
        %1281 = vmatpush1.bf16.msra.mxu0 %v1272
        %1282 = vmatprep.subr.bf16.mxu0 0
        %1283 = vmatpush1.bf16.msra.mxu0 0
        %1284 = vmatprep.subr.bf16.mxu0 0
        %1285 = vmatpush1.bf16.msra.mxu0 0
        %1286 = vmatprep.subr.bf16.mxu0 0
        %1287 = vmatpush1.bf16.msra.mxu0 0
        %1288 = vmatprep.subr.bf16.mxu0 0
        %1289 = vmatpush1.bf16.msra.mxu0 0
        %1290 = vmatprep.subr.bf16.mxu0 0
        %1291 = vmatpush1.bf16.msra.mxu0 0
        %1292 = vmatprep.subr.bf16.mxu0 0
        %1293 = vmatpush1.bf16.msra.mxu0 0
        %1294 = vmatprep.subr.bf16.mxu0 0
        %1295 = vmatpush1.bf16.msra.mxu0 0
        %1296 = vmatprep.subr.bf16.mxu0 0
        %1297 = vmatpush1.bf16.msra.mxu0 0
        %1298 = vmatprep.subr.bf16.mxu0 0
        %1299 = vmatpush1.bf16.msra.mxu0 0
        %1300 = vmatprep.subr.bf16.mxu0 0
        %1301 = vmatpush1.bf16.msra.mxu0 0
        %1302 = vmatprep.subr.bf16.mxu0 0
        %1303 = vmatpush1.bf16.msra.mxu0 0
        %1304 = vmatprep.subr.bf16.mxu0 0
        %1305 = vmatpush1.bf16.msra.mxu0 0
        %1306 = vmatprep.subr.bf16.mxu0 0
        %1307 = vmatpush1.bf16.msra.mxu0 0
        %1308 = vmatprep.subr.bf16.mxu0 0
        %1309 = vmatpush1.bf16.msra.mxu0 0
        %1310 = vmatprep.mubr.bf16.mxu0 0
        %1311 = vmatmul.mubr.bf16.gmra.mrb[0].mxu0 %v1276
        %v1312 = vpop.f32.mrb[0].mxu0
        %v1313 = vadd.f32 %v1261, %v1312
        %v1314 = vpop.f32.mrb[0].mxu0
        %v1315 = vpop.f32.mrb[0].mxu0
        %v1316 = vpop.f32.mrb[0].mxu0
        %1317 = vdwg.mxu0
        %1318 = vst.msk [vmem:[%s564] sm:$0xff] %vm599, %v1313
        %v1319 = vmul.f32 %v1250, 0.25
        %1320 = vst.msk [vmem:[%s571] sm:$0xff] %vm779, %v1319
        %s1321 = sand.u32 %s308, 1
        %s1322 = scalar_lea.sflag [#allocation5], %s1321
        %s1323 = sand.u32 %s308, 1
        %s1324 = smul.addr %s1323, 8
        %s1325 = scalar_lea.vmem [#allocation14], %s1324
        %s1326 = sand.u32 %s336, 1
        %s1327 = scalar_lea.sflag [#allocation16], %s1326
        %s1328 = sand.u32 %s336, 1
        %s1329 = smul.addr %s1328, 8
        %s1330 = scalar_lea.vmem [#allocation15], %s1329
        // Predicated region
        $region89: #{tpu_custom_call.1} parent=63 // pred_check
          %p1331 = pneg %p318
        $region90: #{tpu_custom_call.1} parent=63 // pred_check_branch
          %1333 = sbr.rel (%p1331) target = $region92
        $region91: #{tpu_custom_call.1} parent=63 // pred_region
          %s1335 = ssub.s32 128, 128
          %1336 = vsyncadd %s1322, %s1335
          %s1337 = sadd.s32 %s43, %s42
          %s1338 = smul.addr %s1337, 128
          %s1339 = scalar_lea.hbm %s11, %s1338
          %s1341 = sshll.u32 %s1325, 4
          %s1342 = int_to_ptr.vmem [resolvable:$true] %s1341
          %1344 = dma.vmem_to_hbm [thread:$0]  %s1342, 128, %s1339, %s1322
        $region92: #{tpu_custom_call.1} parent=63 // pred_fallthru
          _
        // Predicated region
        $region93: #{tpu_custom_call.1} parent=63 // pred_check
          %p1345 = pneg %p346
        $region94: #{tpu_custom_call.1} parent=63 // pred_check_branch
          %1347 = sbr.rel (%p1345) target = $region96
        $region95: #{tpu_custom_call.1} parent=63 // pred_region
          %s1349 = ssub.s32 128, 128
          %1350 = vsyncadd %s1327, %s1349
          %s1351 = sadd.s32 %s43, %s42
          %s1352 = smul.addr %s1351, 128
          %s1353 = scalar_lea.hbm %s12, %s1352
          %s1355 = sshll.u32 %s1330, 4
          %s1356 = int_to_ptr.vmem [resolvable:$true] %s1355
          %1358 = dma.vmem_to_hbm [thread:$0]  %s1356, 128, %s1353, %s1327
        $region96: #{tpu_custom_call.1} parent=63 // pred_fallthru
          _
      $region64: #{tpu_custom_call.1} parent=5 // pred_fallthru
        _
      %p1359 = scmp.le.s32.totalorder 2, %s33
      // Predicated region
      $region97: #{tpu_custom_call.1} parent=5 // pred_check
        %p1360 = pneg %p1359
      $region98: #{tpu_custom_call.1} parent=5 // pred_check_branch
        %1362 = sbr.rel (%p1360) target = $region100
      $region99: #{tpu_custom_call.1} parent=5 // pred_region
        %s1363 = ssub.s32 %s33, 2
        // Predicated region
        $region101: #{tpu_custom_call.1} parent=99 // pred_check
          %p1364 = pneg %p324
        $region102: #{tpu_custom_call.1} parent=99 // pred_check_branch
          %1366 = sbr.rel (%p1364) target = $region104
        $region103: #{tpu_custom_call.1} parent=99 // pred_region
          %s1367 = sand.u32 %s309, 1
          %s1368 = scalar_lea.sflag [#allocation5], %s1367
          %s1369 = sand.u32 %s309, 1
          %s1370 = smul.addr %s1369, 8
          %s1371 = scalar_lea.vmem [#allocation14], %s1370
          %1372 = dma.done %s1368, 128
        $region104: #{tpu_custom_call.1} parent=99 // pred_fallthru
          _
        // Predicated region
        $region105: #{tpu_custom_call.1} parent=99 // pred_check
          %p1373 = pneg %p352
        $region106: #{tpu_custom_call.1} parent=99 // pred_check_branch
          %1375 = sbr.rel (%p1373) target = $region108
        $region107: #{tpu_custom_call.1} parent=99 // pred_region
          %s1376 = sand.u32 %s337, 1
          %s1377 = scalar_lea.sflag [#allocation16], %s1376
          %s1378 = sand.u32 %s337, 1
          %s1379 = smul.addr %s1378, 8
          %s1380 = scalar_lea.vmem [#allocation15], %s1379
          %1381 = dma.done %s1377, 128
        $region108: #{tpu_custom_call.1} parent=99 // pred_fallthru
          _
      $region100: #{tpu_custom_call.1} parent=5 // pred_fallthru
        _
    $region6: #{tpu_custom_call.1} parent=1 // loop_footer
      %s37 = sadd.s32 1, %s33
    $region7: #{tpu_custom_call.1} parent=1 // loop_footer_branch
      %32 = sbr.rel target = $region3
    $region8: #{tpu_custom_call.1} parent=1 // loop_exit
      _
    %1382 = vsyncpa [#allocation4], 1
    %s1383 = scalar_lea.sflag [#allocation4], 1
    %1384 = vsyncpa %s1383, 1
    %1385 = vsyncpa [#allocation7], 1
    %s1386 = scalar_lea.sflag [#allocation7], 1
    %1387 = vsyncpa %s1386, 1
    %1388 = vsyncpa [#allocation10], 1
    %1389 = vsyncpa [#allocation13], 1
    %1390 = vsyncpa [#allocation5], 1
    %s1391 = scalar_lea.sflag [#allocation5], 1
    %1392 = vsyncpa %s1391, 1
    %1393 = vsyncpa [#allocation16], 1
    %s1394 = scalar_lea.sflag [#allocation16], 1
    %1395 = vsyncpa %s1394, 1

</llo_original>
